<compile_context>
chip_gen: v7x
topology: tpu7x:2x2x1
jax: 0.10.0
libtpu: 0.0.40
codegen_flags: <defaults>
</compile_context>

<pallas_src>
import math

import jax
import jax.numpy as jnp
from jax import lax
from jax.experimental import pallas as pl
from jax.experimental.pallas import tpu as pltpu


def _banded_weight(w_hwio, pad_layout, W):
    """Fold the KW taps + Cin contraction of a conv weight into KH banded matrices.

    Result[kh] has shape (Wp*Cin, W*Cout) with
        Result[kh][(w + pad_layout - p + kw)*Cin + cin, w*Cout + cout] = w[kh, kw, cin, cout]
    so that a row-slice of the padded activation (lane = w_pad*Cin + cin) times
    Result[kh], summed over kh, is exactly the same-padded stride-1 convolution.
    """
    KH, KW, Cin, Cout = w_hwio.shape
    p = KH // 2
    Wp = W + 2 * pad_layout
    eye_w = jnp.eye(W, dtype=w_hwio.dtype)
    per_kh = []
    for kh in range(KH):
        acc = jnp.zeros((Wp * Cin, W * Cout), w_hwio.dtype)
        for kw in range(KW):
            off = pad_layout - p + kw                       # >= 0 since pad_layout >= p
            blockdiag = jnp.kron(eye_w, w_hwio[kh, kw])     # (W*Cin, W*Cout) block-diagonal
            acc = acc.at[off * Cin:(off + W) * Cin, :].add(blockdiag)
        per_kh.append(acc)
    return jnp.stack(per_kh)                                # (KH, Wp*Cin, W*Cout)


def _make_fused_kernel(layer_cfgs, H, W, PL):
    """layer_cfgs: list of (KH, p, cin, cout, relu). One grid step = one image."""
    Wp = W + 2 * PL
    n_layers = len(layer_cfgs)

    def kernel(x_ref, *rest):
        w_refs = rest[:2 * n_layers]          # (bw_0, brow_0, bw_1, brow_1, ...)
        o_ref = rest[2 * n_layers]
        scratch = rest[2 * n_layers + 1:]
        buf_in = scratch[0]                   # (Hp, Wp*cin0) padded layer-0 input
        pp = scratch[1:]                      # two ping-pong padded intermediate buffers

        # In-kernel zero padding: zero the buffer, write the image into its interior.
        cin0 = layer_cfgs[0][2]
        buf_in[...] = jnp.zeros_like(buf_in)
        buf_in[pl.ds(PL, H), pl.ds(PL * cin0, W * cin0)] = x_ref[0]

        src_buf = buf_in
        pp_idx = 0
        for li, (KH, p, cin, cout, relu) in enumerate(layer_cfgs):
            bw_ref = w_refs[2 * li]           # (KH, Wp*cin, W*cout)
            brow_ref = w_refs[2 * li + 1]     # (1, W*cout)
            kdim = Wp * cin

            acc = jnp.zeros((H, W * cout), jnp.float32)
            for kh in range(KH):
                # Static sublane-offset row slice only (no lane relayout),
                # one MXU matmul per kh tap.
                rows = src_buf[pl.ds(PL - p + kh, H), pl.ds(0, kdim)]
                acc = acc + jnp.dot(rows, bw_ref[kh],
                                    preferred_element_type=jnp.float32)

            acc = acc + brow_ref[...]         # lane-dense bias add (VPU)
            if relu:
                acc = jnp.maximum(acc, 0.0)

            if li == n_layers - 1:
                o_ref[0] = acc.astype(o_ref.dtype)          # lane-dense store
            else:
                dst = pp[pp_idx]
                # Re-zero before writing: keeps the zero-padding border invariant
                # regardless of the channel-interleaved lane layout of this layer.
                dst[...] = jnp.zeros_like(dst)
                dst[pl.ds(PL, H), pl.ds(PL * cout, W * cout)] = acc
                src_buf = dst
                pp_idx = 1 - pp_idx

    return kernel


def _dcn_forward_impl(x_nchw, params):
    """DCN.forward: NCHW in, NCHW out (matching the PyTorch module)."""
    N, cin0, H, W = x_nchw.shape
    n_layers = len(params)

    cfgs = []
    cprev = cin0
    for li, (w, _b) in enumerate(params):
        KH, KW, wcin, cout = w.shape
        assert KH == KW and KH % 2 == 1, "only odd square kernels supported"
        assert wcin == cprev
        cfgs.append((KH, KH // 2, cprev, cout, li < n_layers - 1))
        cprev = cout

    PL = max(c[1] for c in cfgs)              # common layout padding = max k//2
    Hp, Wp = H + 2 * PL, W + 2 * PL
    cout_f = cfgs[-1][3]

    # Input: NCHW -> channel-interleaved rows (N, H, W*Cin), lane = w*Cin + cin.
    x_rows = jnp.transpose(x_nchw, (0, 2, 3, 1)).reshape(N, H, W * cin0)

    flat_inputs = [x_rows]
    in_specs = [pl.BlockSpec((1, H, W * cin0), lambda n: (n, 0, 0))]
    for (w, b), (KH, p, cin, cout, relu) in zip(params, cfgs):
        bw = _banded_weight(w, PL, W)                       # (KH, Wp*cin, W*cout)
        brow = jnp.tile(b, W).reshape(1, W * cout)          # bias tiled over lanes
        flat_inputs.append(bw)
        in_specs.append(pl.BlockSpec(bw.shape, lambda n: (0, 0, 0)))
        flat_inputs.append(brow)
        in_specs.append(pl.BlockSpec(brow.shape, lambda n: (0, 0)))

    # Role-specific, exact-width padded scratch buffers:
    #   one for the layer-0 input, two ping-pong buffers for intermediates.
    scratch_shapes = [pltpu.VMEM((Hp, Wp * cin0), jnp.float32)]
    if n_layers > 1:
        cmax_mid = max(c[2] for c in cfgs[1:])
        scratch_shapes += [pltpu.VMEM((Hp, Wp * cmax_mid), jnp.float32)] * 2

    kernel = _make_fused_kernel(cfgs, H, W, PL)

    out_rows = pl.pallas_call(
        kernel,
        grid=(N,),
        in_specs=in_specs,
        out_specs=pl.BlockSpec((1, H, W * cout_f), lambda n: (n, 0, 0)),
        out_shape=jax.ShapeDtypeStruct((N, H, W * cout_f), x_nchw.dtype),
        scratch_shapes=scratch_shapes,
        compiler_params=pltpu.CompilerParams(
            dimension_semantics=("parallel",)),
    )(*flat_inputs)

    # (N, H, W*Cout) -> NCHW.
    return jnp.transpose(out_rows.reshape(N, H, W, cout_f), (0, 3, 1, 2))


dcn_forward = jax.jit(_dcn_forward_impl)


def init_dcn_params(key, in_chals, out_chals, layers, chals, fsz0, fsz):
    """Deterministic init mimicking nn.Conv2d default (uniform +-1/sqrt(fan_in)).
    Returns a list of (w_hwio, b); ReLU is applied after every layer except the last."""
    params = []
    c_in = in_chals
    for ii in range(layers):
        k = fsz0 if ii == 0 else fsz
        key, kw_key, kb_key = jax.random.split(key, 3)
        bound = 1.0 / math.sqrt(c_in * k * k)
        w = jax.random.uniform(kw_key, (k, k, c_in, chals), jnp.float32, -bound, bound)
        b = jax.random.uniform(kb_key, (chals,), jnp.float32, -bound, bound)
        params.append((w, b))
        c_in = chals
    key, kw_key, kb_key = jax.random.split(key, 3)
    bound = 1.0 / math.sqrt(c_in * fsz * fsz)
    w = jax.random.uniform(kw_key, (fsz, fsz, c_in, out_chals), jnp.float32, -bound, bound)
    b = jax.random.uniform(kb_key, (out_chals,), jnp.float32, -bound, bound)
    params.append((w, b))
    return params


def _dcn_reference(x_nchw, params):
    """Pure-JAX reference (lax.conv) for correctness checking."""
    x = jnp.transpose(x_nchw, (0, 2, 3, 1))
    for li, (w, b) in enumerate(params):
        kh = w.shape[0]
        dn = lax.conv_dimension_numbers(x.shape, w.shape, ("NHWC", "HWIO", "NHWC"))
        y = lax.conv_general_dilated(
            x, w, window_strides=(1, 1),
            padding=[(kh // 2, kh // 2), (kh // 2, kh // 2)],
            dimension_numbers=dn)
        y = y + b[None, None, None, :]
        x = jnp.maximum(y, 0.0) if li < len(params) - 1 else y
    return jnp.transpose(x, (0, 3, 1, 2))


if __name__ == "__main__":
    # DCN(in_chals=4, out_chals=4, layers=3, chals=8, fsz0=5, fsz=3); input NCHW (2,4,16,16).
    in_chals, out_chals, n_layers, chals, fsz0, fsz = 4, 4, 3, 8, 5, 3

    key = jax.random.PRNGKey(0)
    key, xkey = jax.random.split(key)
    x = jax.random.normal(xkey, (2, in_chals, 16, 16), jnp.float32)

    params = init_dcn_params(key, in_chals, out_chals, n_layers, chals, fsz0, fsz)

    out = jax.block_until_ready(dcn_forward(x, params))
    ref = jax.block_until_ready(_dcn_reference(x, params))

    assert out.shape == (2, out_chals, 16, 16)
    err = float(jnp.max(jnp.abs(out - ref)))
    assert err < 1e-4, f"max abs error {err}"
    print("KERNEL_OK")
</pallas_src>

<mosaic_0001>
module attributes {stable_mosaic.version = 11 : i64} {
  func.func @kernel(%arg0: i32, %arg1: memref<1x16x64xf32, #tpu.memory_space<vmem>>, %arg2: memref<5x80x128xf32, #tpu.memory_space<vmem>>, %arg3: memref<1x128xf32, #tpu.memory_space<vmem>>, %arg4: memref<3x160x128xf32, #tpu.memory_space<vmem>>, %arg5: memref<1x128xf32, #tpu.memory_space<vmem>>, %arg6: memref<3x160x128xf32, #tpu.memory_space<vmem>>, %arg7: memref<1x128xf32, #tpu.memory_space<vmem>>, %arg8: memref<3x160x64xf32, #tpu.memory_space<vmem>>, %arg9: memref<1x64xf32, #tpu.memory_space<vmem>>, %arg10: memref<1x16x64xf32, #tpu.memory_space<vmem>>, %arg11: memref<20x80xf32, #tpu.memory_space<vmem>>, %arg12: memref<20x160xf32, #tpu.memory_space<vmem>>, %arg13: memref<20x160xf32, #tpu.memory_space<vmem>>) attributes {dimension_semantics = [#tpu.dimension_semantics<parallel>], iteration_bounds = array<i64: 2>, scalar_prefetch = 0 : i64, scratch_operands = 3 : i64, tpu.core_type = #tpu.core_type<tc>, window_params = [{transform_indices = @transform_0, window_bounds = array<i64: 1, 16, 64>}, {pipeline_mode = #tpu.pipeline_mode<synchronous>, transform_indices = @transform_1, window_bounds = array<i64: 5, 80, 128>}, {pipeline_mode = #tpu.pipeline_mode<synchronous>, transform_indices = @transform_2, window_bounds = array<i64: 1, 128>}, {pipeline_mode = #tpu.pipeline_mode<synchronous>, transform_indices = @transform_3, window_bounds = array<i64: 3, 160, 128>}, {pipeline_mode = #tpu.pipeline_mode<synchronous>, transform_indices = @transform_4, window_bounds = array<i64: 1, 128>}, {pipeline_mode = #tpu.pipeline_mode<synchronous>, transform_indices = @transform_5, window_bounds = array<i64: 3, 160, 128>}, {pipeline_mode = #tpu.pipeline_mode<synchronous>, transform_indices = @transform_6, window_bounds = array<i64: 1, 128>}, {pipeline_mode = #tpu.pipeline_mode<synchronous>, transform_indices = @transform_7, window_bounds = array<i64: 3, 160, 64>}, {pipeline_mode = #tpu.pipeline_mode<synchronous>, transform_indices = @transform_8, window_bounds = array<i64: 1, 64>}, {transform_indices = @transform_9, window_bounds = array<i64: 1, 16, 64>}]} {
    %cst = arith.constant 0.000000e+00 : f32
    %0 = vector.broadcast %cst : f32 to vector<20x80xf32>
    %c0 = arith.constant 0 : index
    %c0_0 = arith.constant 0 : index
    %1 = vector.load %arg11[%c0, %c0_0] : memref<20x80xf32, #tpu.memory_space<vmem>>, vector<20x80xf32>
    tpu.vector_store %arg11[%c0, %c0_0], %0 {strides = array<i32>} : memref<20x80xf32, #tpu.memory_space<vmem>>, vector<20x80xf32>,
    %c0_1 = arith.constant 0 : index
    %c0_2 = arith.constant 0 : index
    %c0_3 = arith.constant 0 : index
    %2 = vector.load %arg1[%c0_1, %c0_2, %c0_3] : memref<1x16x64xf32, #tpu.memory_space<vmem>>, vector<1x16x64xf32>
    %3 = vector.shape_cast %2 : vector<1x16x64xf32> to vector<16x64xf32>
    %c2 = arith.constant 2 : index
    %c8 = arith.constant 8 : index
    %4 = vector.load %arg11[%c2, %c8] : memref<20x80xf32, #tpu.memory_space<vmem>>, vector<16x64xf32>
    tpu.vector_store %arg11[%c2, %c8], %3 {strides = array<i32>} : memref<20x80xf32, #tpu.memory_space<vmem>>, vector<16x64xf32>,
    %cst_4 = arith.constant 0.000000e+00 : f32
    %5 = vector.broadcast %cst_4 : f32 to vector<16x128xf32>
    %c0_5 = arith.constant 0 : index
    %c0_6 = arith.constant 0 : index
    %6 = vector.load %arg11[%c0_5, %c0_6] : memref<20x80xf32, #tpu.memory_space<vmem>>, vector<16x80xf32>
    %c0_7 = arith.constant 0 : index
    %c0_8 = arith.constant 0 : index
    %c0_9 = arith.constant 0 : index
    %7 = vector.load %arg2[%c0_7, %c0_8, %c0_9] : memref<5x80x128xf32, #tpu.memory_space<vmem>>, vector<1x80x128xf32>
    %8 = vector.shape_cast %7 : vector<1x80x128xf32> to vector<80x128xf32>
    %cst_10 = arith.constant dense<0.000000e+00> : vector<16x128xf32>
    %9 = tpu.matmul %6, %8, %cst_10 {dimension_numbers = #tpu.dot_dimension_numbers<[1], [0], [0], [1], [0, 0, 1, 1], [], []>} : vector<16x80xf32>, vector<80x128xf32>, vector<16x128xf32> -> vector<16x128xf32>
    %10 = arith.addf %5, %9 : vector<16x128xf32>
    %c1 = arith.constant 1 : index
    %c0_11 = arith.constant 0 : index
    %11 = vector.load %arg11[%c1, %c0_11] : memref<20x80xf32, #tpu.memory_space<vmem>>, vector<16x80xf32>
    %c1_12 = arith.constant 1 : index
    %c0_13 = arith.constant 0 : index
    %c0_14 = arith.constant 0 : index
    %12 = vector.load %arg2[%c1_12, %c0_13, %c0_14] : memref<5x80x128xf32, #tpu.memory_space<vmem>>, vector<1x80x128xf32>
    %13 = vector.shape_cast %12 : vector<1x80x128xf32> to vector<80x128xf32>
    %cst_15 = arith.constant dense<0.000000e+00> : vector<16x128xf32>
    %14 = tpu.matmul %11, %13, %cst_15 {dimension_numbers = #tpu.dot_dimension_numbers<[1], [0], [0], [1], [0, 0, 1, 1], [], []>} : vector<16x80xf32>, vector<80x128xf32>, vector<16x128xf32> -> vector<16x128xf32>
    %15 = arith.addf %10, %14 : vector<16x128xf32>
    %c2_16 = arith.constant 2 : index
    %c0_17 = arith.constant 0 : index
    %16 = vector.load %arg11[%c2_16, %c0_17] : memref<20x80xf32, #tpu.memory_space<vmem>>, vector<16x80xf32>
    %c2_18 = arith.constant 2 : index
    %c0_19 = arith.constant 0 : index
    %c0_20 = arith.constant 0 : index
    %17 = vector.load %arg2[%c2_18, %c0_19, %c0_20] : memref<5x80x128xf32, #tpu.memory_space<vmem>>, vector<1x80x128xf32>
    %18 = vector.shape_cast %17 : vector<1x80x128xf32> to vector<80x128xf32>
    %cst_21 = arith.constant dense<0.000000e+00> : vector<16x128xf32>
    %19 = tpu.matmul %16, %18, %cst_21 {dimension_numbers = #tpu.dot_dimension_numbers<[1], [0], [0], [1], [0, 0, 1, 1], [], []>} : vector<16x80xf32>, vector<80x128xf32>, vector<16x128xf32> -> vector<16x128xf32>
    %20 = arith.addf %15, %19 : vector<16x128xf32>
    %c3 = arith.constant 3 : index
    %c0_22 = arith.constant 0 : index
    %21 = vector.load %arg11[%c3, %c0_22] : memref<20x80xf32, #tpu.memory_space<vmem>>, vector<16x80xf32>
    %c3_23 = arith.constant 3 : index
    %c0_24 = arith.constant 0 : index
    %c0_25 = arith.constant 0 : index
    %22 = vector.load %arg2[%c3_23, %c0_24, %c0_25] : memref<5x80x128xf32, #tpu.memory_space<vmem>>, vector<1x80x128xf32>
    %23 = vector.shape_cast %22 : vector<1x80x128xf32> to vector<80x128xf32>
    %cst_26 = arith.constant dense<0.000000e+00> : vector<16x128xf32>
    %24 = tpu.matmul %21, %23, %cst_26 {dimension_numbers = #tpu.dot_dimension_numbers<[1], [0], [0], [1], [0, 0, 1, 1], [], []>} : vector<16x80xf32>, vector<80x128xf32>, vector<16x128xf32> -> vector<16x128xf32>
    %25 = arith.addf %20, %24 : vector<16x128xf32>
    %c4 = arith.constant 4 : index
    %c0_27 = arith.constant 0 : index
    %26 = vector.load %arg11[%c4, %c0_27] : memref<20x80xf32, #tpu.memory_space<vmem>>, vector<16x80xf32>
    %c4_28 = arith.constant 4 : index
    %c0_29 = arith.constant 0 : index
    %c0_30 = arith.constant 0 : index
    %27 = vector.load %arg2[%c4_28, %c0_29, %c0_30] : memref<5x80x128xf32, #tpu.memory_space<vmem>>, vector<1x80x128xf32>
    %28 = vector.shape_cast %27 : vector<1x80x128xf32> to vector<80x128xf32>
    %cst_31 = arith.constant dense<0.000000e+00> : vector<16x128xf32>
    %29 = tpu.matmul %26, %28, %cst_31 {dimension_numbers = #tpu.dot_dimension_numbers<[1], [0], [0], [1], [0, 0, 1, 1], [], []>} : vector<16x80xf32>, vector<80x128xf32>, vector<16x128xf32> -> vector<16x128xf32>
    %30 = arith.addf %25, %29 : vector<16x128xf32>
    %c0_32 = arith.constant 0 : index
    %c0_33 = arith.constant 0 : index
    %31 = vector.load %arg3[%c0_32, %c0_33] : memref<1x128xf32, #tpu.memory_space<vmem>>, vector<1x128xf32>
    %32 = vector.broadcast %31 : vector<1x128xf32> to vector<16x128xf32>
    %33 = arith.addf %30, %32 : vector<16x128xf32>
    %cst_34 = arith.constant 0.000000e+00 : f32
    %34 = vector.broadcast %cst_34 : f32 to vector<16x128xf32>
    %35 = arith.maximumf %33, %34 : vector<16x128xf32>
    %cst_35 = arith.constant 0.000000e+00 : f32
    %36 = vector.broadcast %cst_35 : f32 to vector<20x160xf32>
    %c0_36 = arith.constant 0 : index
    %c0_37 = arith.constant 0 : index
    %37 = vector.load %arg12[%c0_36, %c0_37] : memref<20x160xf32, #tpu.memory_space<vmem>>, vector<20x160xf32>
    tpu.vector_store %arg12[%c0_36, %c0_37], %36 {strides = array<i32>} : memref<20x160xf32, #tpu.memory_space<vmem>>, vector<20x160xf32>,
    %c2_38 = arith.constant 2 : index
    %c16 = arith.constant 16 : index
    %38 = vector.load %arg12[%c2_38, %c16] : memref<20x160xf32, #tpu.memory_space<vmem>>, vector<16x128xf32>
    tpu.vector_store %arg12[%c2_38, %c16], %35 {strides = array<i32>} : memref<20x160xf32, #tpu.memory_space<vmem>>, vector<16x128xf32>,
    %cst_39 = arith.constant 0.000000e+00 : f32
    %39 = vector.broadcast %cst_39 : f32 to vector<16x128xf32>
    %c1_40 = arith.constant 1 : index
    %c0_41 = arith.constant 0 : index
    %40 = vector.load %arg12[%c1_40, %c0_41] : memref<20x160xf32, #tpu.memory_space<vmem>>, vector<16x160xf32>
    %c0_42 = arith.constant 0 : index
    %c0_43 = arith.constant 0 : index
    %c0_44 = arith.constant 0 : index
    %41 = vector.load %arg4[%c0_42, %c0_43, %c0_44] : memref<3x160x128xf32, #tpu.memory_space<vmem>>, vector<1x160x128xf32>
    %42 = vector.shape_cast %41 : vector<1x160x128xf32> to vector<160x128xf32>
    %cst_45 = arith.constant dense<0.000000e+00> : vector<16x128xf32>
    %43 = tpu.matmul %40, %42, %cst_45 {dimension_numbers = #tpu.dot_dimension_numbers<[1], [0], [0], [1], [0, 0, 1, 1], [], []>} : vector<16x160xf32>, vector<160x128xf32>, vector<16x128xf32> -> vector<16x128xf32>
    %44 = arith.addf %39, %43 : vector<16x128xf32>
    %c2_46 = arith.constant 2 : index
    %c0_47 = arith.constant 0 : index
    %45 = vector.load %arg12[%c2_46, %c0_47] : memref<20x160xf32, #tpu.memory_space<vmem>>, vector<16x160xf32>
    %c1_48 = arith.constant 1 : index
    %c0_49 = arith.constant 0 : index
    %c0_50 = arith.constant 0 : index
    %46 = vector.load %arg4[%c1_48, %c0_49, %c0_50] : memref<3x160x128xf32, #tpu.memory_space<vmem>>, vector<1x160x128xf32>
    %47 = vector.shape_cast %46 : vector<1x160x128xf32> to vector<160x128xf32>
    %cst_51 = arith.constant dense<0.000000e+00> : vector<16x128xf32>
    %48 = tpu.matmul %45, %47, %cst_51 {dimension_numbers = #tpu.dot_dimension_numbers<[1], [0], [0], [1], [0, 0, 1, 1], [], []>} : vector<16x160xf32>, vector<160x128xf32>, vector<16x128xf32> -> vector<16x128xf32>
    %49 = arith.addf %44, %48 : vector<16x128xf32>
    %c3_52 = arith.constant 3 : index
    %c0_53 = arith.constant 0 : index
    %50 = vector.load %arg12[%c3_52, %c0_53] : memref<20x160xf32, #tpu.memory_space<vmem>>, vector<16x160xf32>
    %c2_54 = arith.constant 2 : index
    %c0_55 = arith.constant 0 : index
    %c0_56 = arith.constant 0 : index
    %51 = vector.load %arg4[%c2_54, %c0_55, %c0_56] : memref<3x160x128xf32, #tpu.memory_space<vmem>>, vector<1x160x128xf32>
    %52 = vector.shape_cast %51 : vector<1x160x128xf32> to vector<160x128xf32>
    %cst_57 = arith.constant dense<0.000000e+00> : vector<16x128xf32>
    %53 = tpu.matmul %50, %52, %cst_57 {dimension_numbers = #tpu.dot_dimension_numbers<[1], [0], [0], [1], [0, 0, 1, 1], [], []>} : vector<16x160xf32>, vector<160x128xf32>, vector<16x128xf32> -> vector<16x128xf32>
    %54 = arith.addf %49, %53 : vector<16x128xf32>
    %c0_58 = arith.constant 0 : index
    %c0_59 = arith.constant 0 : index
    %55 = vector.load %arg5[%c0_58, %c0_59] : memref<1x128xf32, #tpu.memory_space<vmem>>, vector<1x128xf32>
    %56 = vector.broadcast %55 : vector<1x128xf32> to vector<16x128xf32>
    %57 = arith.addf %54, %56 : vector<16x128xf32>
    %cst_60 = arith.constant 0.000000e+00 : f32
    %58 = vector.broadcast %cst_60 : f32 to vector<16x128xf32>
    %59 = arith.maximumf %57, %58 : vector<16x128xf32>
    %cst_61 = arith.constant 0.000000e+00 : f32
    %60 = vector.broadcast %cst_61 : f32 to vector<20x160xf32>
    %c0_62 = arith.constant 0 : index
    %c0_63 = arith.constant 0 : index
    %61 = vector.load %arg13[%c0_62, %c0_63] : memref<20x160xf32, #tpu.memory_space<vmem>>, vector<20x160xf32>
    tpu.vector_store %arg13[%c0_62, %c0_63], %60 {strides = array<i32>} : memref<20x160xf32, #tpu.memory_space<vmem>>, vector<20x160xf32>,
    %c2_64 = arith.constant 2 : index
    %c16_65 = arith.constant 16 : index
    %62 = vector.load %arg13[%c2_64, %c16_65] : memref<20x160xf32, #tpu.memory_space<vmem>>, vector<16x128xf32>
    tpu.vector_store %arg13[%c2_64, %c16_65], %59 {strides = array<i32>} : memref<20x160xf32, #tpu.memory_space<vmem>>, vector<16x128xf32>,
    %cst_66 = arith.constant 0.000000e+00 : f32
    %63 = vector.broadcast %cst_66 : f32 to vector<16x128xf32>
    %c1_67 = arith.constant 1 : index
    %c0_68 = arith.constant 0 : index
    %64 = vector.load %arg13[%c1_67, %c0_68] : memref<20x160xf32, #tpu.memory_space<vmem>>, vector<16x160xf32>
    %c0_69 = arith.constant 0 : index
    %c0_70 = arith.constant 0 : index
    %c0_71 = arith.constant 0 : index
    %65 = vector.load %arg6[%c0_69, %c0_70, %c0_71] : memref<3x160x128xf32, #tpu.memory_space<vmem>>, vector<1x160x128xf32>
    %66 = vector.shape_cast %65 : vector<1x160x128xf32> to vector<160x128xf32>
    %cst_72 = arith.constant dense<0.000000e+00> : vector<16x128xf32>
    %67 = tpu.matmul %64, %66, %cst_72 {dimension_numbers = #tpu.dot_dimension_numbers<[1], [0], [0], [1], [0, 0, 1, 1], [], []>} : vector<16x160xf32>, vector<160x128xf32>, vector<16x128xf32> -> vector<16x128xf32>
    %68 = arith.addf %63, %67 : vector<16x128xf32>
    %c2_73 = arith.constant 2 : index
    %c0_74 = arith.constant 0 : index
    %69 = vector.load %arg13[%c2_73, %c0_74] : memref<20x160xf32, #tpu.memory_space<vmem>>, vector<16x160xf32>
    %c1_75 = arith.constant 1 : index
    %c0_76 = arith.constant 0 : index
    %c0_77 = arith.constant 0 : index
    %70 = vector.load %arg6[%c1_75, %c0_76, %c0_77] : memref<3x160x128xf32, #tpu.memory_space<vmem>>, vector<1x160x128xf32>
    %71 = vector.shape_cast %70 : vector<1x160x128xf32> to vector<160x128xf32>
    %cst_78 = arith.constant dense<0.000000e+00> : vector<16x128xf32>
    %72 = tpu.matmul %69, %71, %cst_78 {dimension_numbers = #tpu.dot_dimension_numbers<[1], [0], [0], [1], [0, 0, 1, 1], [], []>} : vector<16x160xf32>, vector<160x128xf32>, vector<16x128xf32> -> vector<16x128xf32>
    %73 = arith.addf %68, %72 : vector<16x128xf32>
    %c3_79 = arith.constant 3 : index
    %c0_80 = arith.constant 0 : index
    %74 = vector.load %arg13[%c3_79, %c0_80] : memref<20x160xf32, #tpu.memory_space<vmem>>, vector<16x160xf32>
    %c2_81 = arith.constant 2 : index
    %c0_82 = arith.constant 0 : index
    %c0_83 = arith.constant 0 : index
    %75 = vector.load %arg6[%c2_81, %c0_82, %c0_83] : memref<3x160x128xf32, #tpu.memory_space<vmem>>, vector<1x160x128xf32>
    %76 = vector.shape_cast %75 : vector<1x160x128xf32> to vector<160x128xf32>
    %cst_84 = arith.constant dense<0.000000e+00> : vector<16x128xf32>
    %77 = tpu.matmul %74, %76, %cst_84 {dimension_numbers = #tpu.dot_dimension_numbers<[1], [0], [0], [1], [0, 0, 1, 1], [], []>} : vector<16x160xf32>, vector<160x128xf32>, vector<16x128xf32> -> vector<16x128xf32>
    %78 = arith.addf %73, %77 : vector<16x128xf32>
    %c0_85 = arith.constant 0 : index
    %c0_86 = arith.constant 0 : index
    %79 = vector.load %arg7[%c0_85, %c0_86] : memref<1x128xf32, #tpu.memory_space<vmem>>, vector<1x128xf32>
    %80 = vector.broadcast %79 : vector<1x128xf32> to vector<16x128xf32>
    %81 = arith.addf %78, %80 : vector<16x128xf32>
    %cst_87 = arith.constant 0.000000e+00 : f32
    %82 = vector.broadcast %cst_87 : f32 to vector<16x128xf32>
    %83 = arith.maximumf %81, %82 : vector<16x128xf32>
    %cst_88 = arith.constant 0.000000e+00 : f32
    %84 = vector.broadcast %cst_88 : f32 to vector<20x160xf32>
    %c0_89 = arith.constant 0 : index
    %c0_90 = arith.constant 0 : index
    %85 = vector.load %arg12[%c0_89, %c0_90] : memref<20x160xf32, #tpu.memory_space<vmem>>, vector<20x160xf32>
    tpu.vector_store %arg12[%c0_89, %c0_90], %84 {strides = array<i32>} : memref<20x160xf32, #tpu.memory_space<vmem>>, vector<20x160xf32>,
    %c2_91 = arith.constant 2 : index
    %c16_92 = arith.constant 16 : index
    %86 = vector.load %arg12[%c2_91, %c16_92] : memref<20x160xf32, #tpu.memory_space<vmem>>, vector<16x128xf32>
    tpu.vector_store %arg12[%c2_91, %c16_92], %83 {strides = array<i32>} : memref<20x160xf32, #tpu.memory_space<vmem>>, vector<16x128xf32>,
    %cst_93 = arith.constant 0.000000e+00 : f32
    %87 = vector.broadcast %cst_93 : f32 to vector<16x64xf32>
    %c1_94 = arith.constant 1 : index
    %c0_95 = arith.constant 0 : index
    %88 = vector.load %arg12[%c1_94, %c0_95] : memref<20x160xf32, #tpu.memory_space<vmem>>, vector<16x160xf32>
    %c0_96 = arith.constant 0 : index
    %c0_97 = arith.constant 0 : index
    %c0_98 = arith.constant 0 : index
    %89 = vector.load %arg8[%c0_96, %c0_97, %c0_98] : memref<3x160x64xf32, #tpu.memory_space<vmem>>, vector<1x160x64xf32>
    %90 = vector.shape_cast %89 : vector<1x160x64xf32> to vector<160x64xf32>
    %cst_99 = arith.constant dense<0.000000e+00> : vector<16x64xf32>
    %91 = tpu.matmul %88, %90, %cst_99 {dimension_numbers = #tpu.dot_dimension_numbers<[1], [0], [0], [1], [0, 0, 1, 1], [], []>} : vector<16x160xf32>, vector<160x64xf32>, vector<16x64xf32> -> vector<16x64xf32>
    %92 = arith.addf %87, %91 : vector<16x64xf32>
    %c2_100 = arith.constant 2 : index
    %c0_101 = arith.constant 0 : index
    %93 = vector.load %arg12[%c2_100, %c0_101] : memref<20x160xf32, #tpu.memory_space<vmem>>, vector<16x160xf32>
    %c1_102 = arith.constant 1 : index
    %c0_103 = arith.constant 0 : index
    %c0_104 = arith.constant 0 : index
    %94 = vector.load %arg8[%c1_102, %c0_103, %c0_104] : memref<3x160x64xf32, #tpu.memory_space<vmem>>, vector<1x160x64xf32>
    %95 = vector.shape_cast %94 : vector<1x160x64xf32> to vector<160x64xf32>
    %cst_105 = arith.constant dense<0.000000e+00> : vector<16x64xf32>
    %96 = tpu.matmul %93, %95, %cst_105 {dimension_numbers = #tpu.dot_dimension_numbers<[1], [0], [0], [1], [0, 0, 1, 1], [], []>} : vector<16x160xf32>, vector<160x64xf32>, vector<16x64xf32> -> vector<16x64xf32>
    %97 = arith.addf %92, %96 : vector<16x64xf32>
    %c3_106 = arith.constant 3 : index
    %c0_107 = arith.constant 0 : index
    %98 = vector.load %arg12[%c3_106, %c0_107] : memref<20x160xf32, #tpu.memory_space<vmem>>, vector<16x160xf32>
    %c2_108 = arith.constant 2 : index
    %c0_109 = arith.constant 0 : index
    %c0_110 = arith.constant 0 : index
    %99 = vector.load %arg8[%c2_108, %c0_109, %c0_110] : memref<3x160x64xf32, #tpu.memory_space<vmem>>, vector<1x160x64xf32>
    %100 = vector.shape_cast %99 : vector<1x160x64xf32> to vector<160x64xf32>
    %cst_111 = arith.constant dense<0.000000e+00> : vector<16x64xf32>
    %101 = tpu.matmul %98, %100, %cst_111 {dimension_numbers = #tpu.dot_dimension_numbers<[1], [0], [0], [1], [0, 0, 1, 1], [], []>} : vector<16x160xf32>, vector<160x64xf32>, vector<16x64xf32> -> vector<16x64xf32>
    %102 = arith.addf %97, %101 : vector<16x64xf32>
    %c0_112 = arith.constant 0 : index
    %c0_113 = arith.constant 0 : index
    %103 = vector.load %arg9[%c0_112, %c0_113] : memref<1x64xf32, #tpu.memory_space<vmem>>, vector<1x64xf32>
    %104 = vector.broadcast %103 : vector<1x64xf32> to vector<16x64xf32>
    %105 = arith.addf %102, %104 : vector<16x64xf32>
    %c0_114 = arith.constant 0 : index
    %c0_115 = arith.constant 0 : index
    %c0_116 = arith.constant 0 : index
    %106 = vector.load %arg10[%c0_114, %c0_115, %c0_116] : memref<1x16x64xf32, #tpu.memory_space<vmem>>, vector<1x16x64xf32>
    %107 = vector.shape_cast %106 : vector<1x16x64xf32> to vector<16x64xf32>
    %108 = vector.shape_cast %105 : vector<16x64xf32> to vector<1x16x64xf32>
    tpu.vector_store %arg10[%c0_114, %c0_115, %c0_116], %108 {strides = array<i32>} : memref<1x16x64xf32, #tpu.memory_space<vmem>>, vector<1x16x64xf32>,
    return
  }
  func.func @transform_0(%arg0: i32) -> (i32, i32, i32) {
    %c0_i32 = arith.constant 0 : i32
    %c0_i32_0 = arith.constant 0 : i32
    %c0_i32_1 = arith.constant 0 : i32
    return %arg0, %c0_i32, %c0_i32_0 : i32, i32, i32
  }
  func.func @transform_1(%arg0: i32) -> (i32, i32, i32) {
    %c0_i32 = arith.constant 0 : i32
    %c0_i32_0 = arith.constant 0 : i32
    %c0_i32_1 = arith.constant 0 : i32
    %c0_i32_2 = arith.constant 0 : i32
    return %c0_i32, %c0_i32_0, %c0_i32_1 : i32, i32, i32
  }
  func.func @transform_2(%arg0: i32) -> (i32, i32) {
    %c0_i32 = arith.constant 0 : i32
    %c0_i32_0 = arith.constant 0 : i32
    %c0_i32_1 = arith.constant 0 : i32
    return %c0_i32, %c0_i32_0 : i32, i32
  }
  func.func @transform_3(%arg0: i32) -> (i32, i32, i32) {
    %c0_i32 = arith.constant 0 : i32
    %c0_i32_0 = arith.constant 0 : i32
    %c0_i32_1 = arith.constant 0 : i32
    %c0_i32_2 = arith.constant 0 : i32
    return %c0_i32, %c0_i32_0, %c0_i32_1 : i32, i32, i32
  }
  func.func @transform_4(%arg0: i32) -> (i32, i32) {
    %c0_i32 = arith.constant 0 : i32
    %c0_i32_0 = arith.constant 0 : i32
    %c0_i32_1 = arith.constant 0 : i32
    return %c0_i32, %c0_i32_0 : i32, i32
  }
  func.func @transform_5(%arg0: i32) -> (i32, i32, i32) {
    %c0_i32 = arith.constant 0 : i32
    %c0_i32_0 = arith.constant 0 : i32
    %c0_i32_1 = arith.constant 0 : i32
    %c0_i32_2 = arith.constant 0 : i32
    return %c0_i32, %c0_i32_0, %c0_i32_1 : i32, i32, i32
  }
  func.func @transform_6(%arg0: i32) -> (i32, i32) {
    %c0_i32 = arith.constant 0 : i32
    %c0_i32_0 = arith.constant 0 : i32
    %c0_i32_1 = arith.constant 0 : i32
    return %c0_i32, %c0_i32_0 : i32, i32
  }
  func.func @transform_7(%arg0: i32) -> (i32, i32, i32) {
    %c0_i32 = arith.constant 0 : i32
    %c0_i32_0 = arith.constant 0 : i32
    %c0_i32_1 = arith.constant 0 : i32
    %c0_i32_2 = arith.constant 0 : i32
    return %c0_i32, %c0_i32_0, %c0_i32_1 : i32, i32, i32
  }
  func.func @transform_8(%arg0: i32) -> (i32, i32) {
    %c0_i32 = arith.constant 0 : i32
    %c0_i32_0 = arith.constant 0 : i32
    %c0_i32_1 = arith.constant 0 : i32
    return %c0_i32, %c0_i32_0 : i32, i32
  }
  func.func @transform_9(%arg0: i32) -> (i32, i32, i32) {
    %c0_i32 = arith.constant 0 : i32
    %c0_i32_0 = arith.constant 0 : i32
    %c0_i32_1 = arith.constant 0 : i32
    return %arg0, %c0_i32, %c0_i32_0 : i32, i32, i32
  }
}

</mosaic_0001>

<llo_original>
// kernel: tile.23
$region0: #{tile.23}
  #allocation0 [shape = 's32[1]{0}', space=sflag, size = 0x4, scoped, tag = 'scoped memory for tile.23']
  %s0 = inlined_call_operand.vmem [shape: f32[8], index: 0, kind: input, shape index: {}]
  %s1 = inlined_call_operand.vmem [shape: f32[16,8], index: 1, kind: output, shape index: {}]
  // Predicated region
  $region2: #{tile.23} parent=0 // pred_check
    _
  $region3: #{tile.23} parent=0 // pred_check_branch
    %3 = sbr.rel (0) target = $region5
  $region4: #{tile.23} parent=0 // pred_region
    _
  $region5: #{tile.23} parent=0 // pred_fallthru
    _
  %v4 = vld [vmem:[%s0] ss:$0 sm:$0xff]
  %5 = vst [vmem:[%s1] sm:$0xff] %v4
  %s6 = scalar_lea.vmem %s1, 8
  %7 = vst [vmem:[%s6] sm:$0xff] %v4

// kernel: tile.24
$region0: #{tile.24}
  %s0 = inlined_call_operand.vmem [shape: f32[16,8], index: 0, kind: input, shape index: {}]
  %s1 = inlined_call_operand.vmem [shape: f32[1,128], index: 1, kind: output, shape index: {}]
  $region1: #{tile.24} parent=0
    #allocation0 [shape = 'u8[4096]{0}', space=vmem, size = 0x1000, scoped, tag = 'scoped mem for output reshape']
    %v2 = vld [vmem:[%s0] sm:$0x1]
    %vm3 = vcmask 64512
    %4 = vst.msk [vmem:[#allocation0] sm:$0x1] %vm3, %v2
    %s5 = scalar_lea.vmem %s0, 15
    %v6 = vld [vmem:[%s5] sm:$0x1]
    %7 = vrot.lane.b32.xlu0 %v6, 120
    %v8 = vpop.permute.xlu0 %7
    %vm9 = vcmask 1048512
    %10 = vst.msk [vmem:[#allocation0] sm:$0x1] %vm9, %v8
    %s11 = scalar_lea.vmem %s0, 14
    %v12 = vld [vmem:[%s11] sm:$0x1]
    %13 = vrot.lane.b32.xlu0 %v12, 112
    %v14 = vpop.permute.xlu0 %13
    %vm15 = vcmask 982912
    %16 = vst.msk [vmem:[#allocation0] sm:$0x1] %vm15, %v14
    %s17 = scalar_lea.vmem %s0, 13
    %v18 = vld [vmem:[%s17] sm:$0x1]
    %19 = vrot.lane.b32.xlu0 %v18, 104
    %v20 = vpop.permute.xlu0 %19
    %vm21 = vcmask 917312
    %22 = vst.msk [vmem:[#allocation0] sm:$0x1] %vm21, %v20
    %s23 = scalar_lea.vmem %s0, 12
    %v24 = vld [vmem:[%s23] sm:$0x1]
    %25 = vrot.lane.b32.xlu0 %v24, 96
    %v26 = vpop.permute.xlu0 %25
    %vm27 = vcmask 851712
    %28 = vst.msk [vmem:[#allocation0] sm:$0x1] %vm27, %v26
    %s29 = scalar_lea.vmem %s0, 11
    %v30 = vld [vmem:[%s29] sm:$0x1]
    %31 = vrot.lane.b32.xlu0 %v30, 88
    %v32 = vpop.permute.xlu0 %31
    %vm33 = vcmask 786112
    %34 = vst.msk [vmem:[#allocation0] sm:$0x1] %vm33, %v32
    %s35 = scalar_lea.vmem %s0, 10
    %v36 = vld [vmem:[%s35] sm:$0x1]
    %37 = vrot.lane.b32.xlu0 %v36, 80
    %v38 = vpop.permute.xlu0 %37
    %vm39 = vcmask 720512
    %40 = vst.msk [vmem:[#allocation0] sm:$0x1] %vm39, %v38
    %s41 = scalar_lea.vmem %s0, 9
    %v42 = vld [vmem:[%s41] sm:$0x1]
    %43 = vrot.lane.b32.xlu0 %v42, 72
    %v44 = vpop.permute.xlu0 %43
    %vm45 = vcmask 654912
    %46 = vst.msk [vmem:[#allocation0] sm:$0x1] %vm45, %v44
    %s47 = scalar_lea.vmem %s0, 8
    %v48 = vld [vmem:[%s47] sm:$0x1]
    %49 = vrot.lane.b32.xlu0 %v48, 64
    %v50 = vpop.permute.xlu0 %49
    %vm51 = vcmask 589312
    %52 = vst.msk [vmem:[#allocation0] sm:$0x1] %vm51, %v50
    %s53 = scalar_lea.vmem %s0, 7
    %v54 = vld [vmem:[%s53] sm:$0x1]
    %55 = vrot.lane.b32.xlu0 %v54, 56
    %v56 = vpop.permute.xlu0 %55
    %vm57 = vcmask 523712
    %58 = vst.msk [vmem:[#allocation0] sm:$0x1] %vm57, %v56
    %s59 = scalar_lea.vmem %s0, 6
    %v60 = vld [vmem:[%s59] sm:$0x1]
    %61 = vrot.lane.b32.xlu0 %v60, 48
    %v62 = vpop.permute.xlu0 %61
    %vm63 = vcmask 458112
    %64 = vst.msk [vmem:[#allocation0] sm:$0x1] %vm63, %v62
    %s65 = scalar_lea.vmem %s0, 5
    %v66 = vld [vmem:[%s65] sm:$0x1]
    %67 = vrot.lane.b32.xlu0 %v66, 40
    %v68 = vpop.permute.xlu0 %67
    %vm69 = vcmask 392512
    %70 = vst.msk [vmem:[#allocation0] sm:$0x1] %vm69, %v68
    %s71 = scalar_lea.vmem %s0, 4
    %v72 = vld [vmem:[%s71] sm:$0x1]
    %73 = vrot.lane.b32.xlu0 %v72, 32
    %v74 = vpop.permute.xlu0 %73
    %vm75 = vcmask 326912
    %76 = vst.msk [vmem:[#allocation0] sm:$0x1] %vm75, %v74
    %s77 = scalar_lea.vmem %s0, 3
    %v78 = vld [vmem:[%s77] sm:$0x1]
    %79 = vrot.lane.b32.xlu0 %v78, 24
    %v80 = vpop.permute.xlu0 %79
    %vm81 = vcmask 261312
    %82 = vst.msk [vmem:[#allocation0] sm:$0x1] %vm81, %v80
    %s83 = scalar_lea.vmem %s0, 2
    %v84 = vld [vmem:[%s83] sm:$0x1]
    %85 = vrot.lane.b32.xlu0 %v84, 16
    %v86 = vpop.permute.xlu0 %85
    %vm87 = vcmask 195712
    %88 = vst.msk [vmem:[#allocation0] sm:$0x1] %vm87, %v86
    %s89 = scalar_lea.vmem %s0, 1
    %v90 = vld [vmem:[%s89] sm:$0x1]
    %91 = vrot.lane.b32.xlu0 %v90, 8
    %v92 = vpop.permute.xlu0 %91
    %vm93 = vcmask 130112
    %94 = vst.msk [vmem:[#allocation0] sm:$0x1] %vm93, %v92
    %s96 = sshllo.u32 0, 1
    %v98 = vld [vmem:[#allocation0] sm:%s96]
    %s99 = sshllo.u32 0, 1
    %100 = vst [vmem:[%s1] sm:%s99] %v98

// kernel: tile.38
$region0: #{tile.38}
  #allocation0 [shape = 's32[1]{0}', space=sflag, size = 0x4, scoped, tag = 'scoped memory for tile.38']
  %s0 = inlined_call_operand.vmem [shape: f32[4], index: 0, kind: input, shape index: {}]
  %s1 = inlined_call_operand.vmem [shape: f32[16,4], index: 1, kind: output, shape index: {}]
  // Predicated region
  $region2: #{tile.38} parent=0 // pred_check
    _
  $region3: #{tile.38} parent=0 // pred_check_branch
    %3 = sbr.rel (0) target = $region5
  $region4: #{tile.38} parent=0 // pred_region
    _
  $region5: #{tile.38} parent=0 // pred_fallthru
    _
  %v4 = vld [vmem:[%s0] ss:$0 sm:$0xff]
  %5 = vst [vmem:[%s1] sm:$0xff] %v4
  %s6 = scalar_lea.vmem %s1, 8
  %7 = vst [vmem:[%s6] sm:$0xff] %v4

// kernel: tile.39
$region0: #{tile.39}
  %s0 = inlined_call_operand.vmem [shape: f32[16,4], index: 0, kind: input, shape index: {}]
  %s1 = inlined_call_operand.vmem [shape: f32[1,64], index: 1, kind: output, shape index: {}]
  $region1: #{tile.39} parent=0
    #allocation0 [shape = 'u8[4096]{0}', space=vmem, size = 0x1000, scoped, tag = 'scoped mem for output reshape']
    %v2 = vld [vmem:[%s0] sm:$0x1]
    %vm3 = vcmask 31744
    %4 = vst.msk [vmem:[#allocation0] sm:$0x1] %vm3, %v2
    %s5 = scalar_lea.vmem %s0, 15
    %v6 = vld [vmem:[%s5] sm:$0x1]
    %7 = vrot.lane.b32.xlu0 %v6, 60
    %v8 = vpop.permute.xlu0 %7
    %vm9 = vcmask 523744
    %10 = vst.msk [vmem:[#allocation0] sm:$0x1] %vm9, %v8
    %s11 = scalar_lea.vmem %s0, 14
    %v12 = vld [vmem:[%s11] sm:$0x1]
    %13 = vrot.lane.b32.xlu0 %v12, 56
    %v14 = vpop.permute.xlu0 %13
    %vm15 = vcmask 490944
    %16 = vst.msk [vmem:[#allocation0] sm:$0x1] %vm15, %v14
    %s17 = scalar_lea.vmem %s0, 13
    %v18 = vld [vmem:[%s17] sm:$0x1]
    %19 = vrot.lane.b32.xlu0 %v18, 52
    %v20 = vpop.permute.xlu0 %19
    %vm21 = vcmask 458144
    %22 = vst.msk [vmem:[#allocation0] sm:$0x1] %vm21, %v20
    %s23 = scalar_lea.vmem %s0, 12
    %v24 = vld [vmem:[%s23] sm:$0x1]
    %25 = vrot.lane.b32.xlu0 %v24, 48
    %v26 = vpop.permute.xlu0 %25
    %vm27 = vcmask 425344
    %28 = vst.msk [vmem:[#allocation0] sm:$0x1] %vm27, %v26
    %s29 = scalar_lea.vmem %s0, 11
    %v30 = vld [vmem:[%s29] sm:$0x1]
    %31 = vrot.lane.b32.xlu0 %v30, 44
    %v32 = vpop.permute.xlu0 %31
    %vm33 = vcmask 392544
    %34 = vst.msk [vmem:[#allocation0] sm:$0x1] %vm33, %v32
    %s35 = scalar_lea.vmem %s0, 10
    %v36 = vld [vmem:[%s35] sm:$0x1]
    %37 = vrot.lane.b32.xlu0 %v36, 40
    %v38 = vpop.permute.xlu0 %37
    %vm39 = vcmask 359744
    %40 = vst.msk [vmem:[#allocation0] sm:$0x1] %vm39, %v38
    %s41 = scalar_lea.vmem %s0, 9
    %v42 = vld [vmem:[%s41] sm:$0x1]
    %43 = vrot.lane.b32.xlu0 %v42, 36
    %v44 = vpop.permute.xlu0 %43
    %vm45 = vcmask 326944
    %46 = vst.msk [vmem:[#allocation0] sm:$0x1] %vm45, %v44
    %s47 = scalar_lea.vmem %s0, 8
    %v48 = vld [vmem:[%s47] sm:$0x1]
    %49 = vrot.lane.b32.xlu0 %v48, 32
    %v50 = vpop.permute.xlu0 %49
    %vm51 = vcmask 294144
    %52 = vst.msk [vmem:[#allocation0] sm:$0x1] %vm51, %v50
    %s53 = scalar_lea.vmem %s0, 7
    %v54 = vld [vmem:[%s53] sm:$0x1]
    %55 = vrot.lane.b32.xlu0 %v54, 28
    %v56 = vpop.permute.xlu0 %55
    %vm57 = vcmask 261344
    %58 = vst.msk [vmem:[#allocation0] sm:$0x1] %vm57, %v56
    %s59 = scalar_lea.vmem %s0, 6
    %v60 = vld [vmem:[%s59] sm:$0x1]
    %61 = vrot.lane.b32.xlu0 %v60, 24
    %v62 = vpop.permute.xlu0 %61
    %vm63 = vcmask 228544
    %64 = vst.msk [vmem:[#allocation0] sm:$0x1] %vm63, %v62
    %s65 = scalar_lea.vmem %s0, 5
    %v66 = vld [vmem:[%s65] sm:$0x1]
    %67 = vrot.lane.b32.xlu0 %v66, 20
    %v68 = vpop.permute.xlu0 %67
    %vm69 = vcmask 195744
    %70 = vst.msk [vmem:[#allocation0] sm:$0x1] %vm69, %v68
    %s71 = scalar_lea.vmem %s0, 4
    %v72 = vld [vmem:[%s71] sm:$0x1]
    %73 = vrot.lane.b32.xlu0 %v72, 16
    %v74 = vpop.permute.xlu0 %73
    %vm75 = vcmask 162944
    %76 = vst.msk [vmem:[#allocation0] sm:$0x1] %vm75, %v74
    %s77 = scalar_lea.vmem %s0, 3
    %v78 = vld [vmem:[%s77] sm:$0x1]
    %79 = vrot.lane.b32.xlu0 %v78, 12
    %v80 = vpop.permute.xlu0 %79
    %vm81 = vcmask 130144
    %82 = vst.msk [vmem:[#allocation0] sm:$0x1] %vm81, %v80
    %s83 = scalar_lea.vmem %s0, 2
    %v84 = vld [vmem:[%s83] sm:$0x1]
    %85 = vrot.lane.b32.xlu0 %v84, 8
    %v86 = vpop.permute.xlu0 %85
    %vm87 = vcmask 97344
    %88 = vst.msk [vmem:[#allocation0] sm:$0x1] %vm87, %v86
    %s89 = scalar_lea.vmem %s0, 1
    %v90 = vld [vmem:[%s89] sm:$0x1]
    %91 = vrot.lane.b32.xlu0 %v90, 4
    %v92 = vpop.permute.xlu0 %91
    %vm93 = vcmask 64544
    %94 = vst.msk [vmem:[#allocation0] sm:$0x1] %vm93, %v92
    %s96 = sshllo.u32 0, 1
    %v98 = vld [vmem:[#allocation0] sm:%s96]
    %s99 = sshllo.u32 0, 1
    %100 = vst [vmem:[%s1] sm:%s99] %v98

// kernel: _dcn_forward_impl.1
$region0: #{_dcn_forward_impl.1}
  #allocation0 [shape = 'u32[]', space=smem, size = 0x4, offset = 0x4, fixed_abs, tag = 'smem constant byte address 0x4 - core index']
  #allocation1 [shape = 'u32[144,128]{1,0:T(1,128)}', space=vmem, size = 0x12000, scoped, tag = 'internal scratch']
  #allocation2 [shape = 'f32[20,80]{1,0:T(8,128)}', space=vmem, size = 0x3000, scoped, tag = 'scratch operand']
  #allocation3 [shape = 'f32[20,160]{1,0:T(8,128)}', space=vmem, size = 0x6000, scoped, tag = 'scratch operand']
  #allocation4 [shape = 'f32[20,160]{1,0:T(8,128)}', space=vmem, size = 0x6000, scoped, tag = 'scratch operand']
  %s0 = inlined_call_operand.vmem [shape: f32[2,16,64], index: 0, kind: input, shape index: {}]
  %s1 = inlined_call_operand.vmem [shape: f32[5,80,128], index: 1, kind: input, shape index: {}]
  %s2 = inlined_call_operand.vmem [shape: f32[1,128], index: 2, kind: input, shape index: {}]
  %s3 = inlined_call_operand.vmem [shape: f32[3,160,128], index: 3, kind: input, shape index: {}]
  %s4 = inlined_call_operand.vmem [shape: f32[1,128], index: 4, kind: input, shape index: {}]
  %s5 = inlined_call_operand.vmem [shape: f32[3,160,128], index: 5, kind: input, shape index: {}]
  %s6 = inlined_call_operand.vmem [shape: f32[1,128], index: 6, kind: input, shape index: {}]
  %s7 = inlined_call_operand.vmem [shape: f32[3,160,64], index: 7, kind: input, shape index: {}]
  %s8 = inlined_call_operand.vmem [shape: f32[1,64], index: 8, kind: input, shape index: {}]
  %s9 = inlined_call_operand.vmem [shape: f32[2,16,64], index: 9, kind: output, shape index: {}]
  %s10 = sld [smem:[#allocation0]]
  $region69: #{_dcn_forward_impl.1} parent=0
    _
  %s12 = ssub.s32 1, %s10
  %s13 = scalar_select 0, %s12, %s10
  loop: start=0, step=1, limit=4
  $region2: #{_dcn_forward_impl.1} parent=0 // loop_pre_header
    _
  $region3: #{_dcn_forward_impl.1} parent=0 // loop_header
    %s15 = sphi 0, %s19
    %p16 = scmp.ge.s32.totalorder %s15, 4
    %s25 = sphi 0, %s27
    %s28 = sphi 0, %s25
    %s29 = sphi 0, %s28
    %s45 = sphi 0, %s29
    %s49 = sphi 0, %s49
    %s51 = sphi 0, %s49
    %s52 = sphi 0, %s51
    %s66 = sphi 0, %s52
    %s70 = sphi 0, %s70
    %s72 = sphi 0, %s70
    %s73 = sphi 0, %s72
    %s87 = sphi 0, %s73
    %s91 = sphi 0, %s91
    %s93 = sphi 0, %s91
    %s94 = sphi 0, %s93
    %s108 = sphi 0, %s94
    %s112 = sphi 0, %s112
    %s114 = sphi 0, %s112
    %s115 = sphi 0, %s114
    %s129 = sphi 0, %s115
    %s133 = sphi 0, %s133
    %s135 = sphi 0, %s133
    %s136 = sphi 0, %s135
    %s150 = sphi 0, %s136
    %s154 = sphi 0, %s154
    %s156 = sphi 0, %s154
    %s157 = sphi 0, %s156
    %s171 = sphi 0, %s157
    %s175 = sphi 0, %s175
    %s177 = sphi 0, %s175
    %s178 = sphi 0, %s177
    %s192 = sphi 0, %s178
    %s196 = sphi 0, %s196
    %s198 = sphi 0, %s196
    %s199 = sphi 0, %s198
    %s213 = sphi 0, %s199
    %s219 = sphi 0, %s221
    %s222 = sphi 0, %s219
    %s223 = sphi 0, %s222
    %s239 = sphi 0, %s223
  $region4: #{_dcn_forward_impl.1} parent=0 // loop_header_branch
    %18 = sbr.rel (%p16) target = $region8
  $region5: #{_dcn_forward_impl.1} parent=0 // loop_body
    %s20 = ssub.s32 %s15, 1
    %s21 = ssub.s32 %s15, 2
    %s22 = sadd.s32 %s15, 1
    %s23 = ssub.s32 %s15, %s22
    %p24 = scmp.eq.s32.totalorder %s23, 0
    %s26 = sadd.s32 %s25, 1
    %s27 = scalar_select %p24, %s25, %s26
    %p30 = pneg %p24
    %p31 = scmp.eq.s32.totalorder %s15, 1
    %p32 = por %p30, %p31
    %p33 = scmp.ne.s32.totalorder %s25, %s28
    %p34 = scmp.eq.s32.totalorder %s15, 0
    %p35 = por %p33, %p34
    %p36 = scmp.ne.s32.totalorder %s25, %s28
    %p37 = scmp.eq.s32.totalorder %s20, 1
    %p38 = por %p36, %p37
    %p39 = scmp.ne.s32.totalorder %s28, %s29
    %p40 = scmp.eq.s32.totalorder %s20, 0
    %p41 = por %p39, %p40
    %p42 = scmp.ne.s32.totalorder %s28, %s29
    %p43 = scmp.eq.s32.totalorder %s21, 1
    %p44 = por %p42, %p43
    %p46 = scmp.ne.s32.totalorder %s29, %s45
    %p47 = scmp.eq.s32.totalorder %s21, 0
    %p48 = por %p46, %p47
    %s50 = sadd.s32 %s49, 1
    %p53 = scmp.eq.s32.totalorder %s15, 1
    %p54 = scmp.ne.s32.totalorder %s49, %s51
    %p55 = scmp.eq.s32.totalorder %s15, 0
    %p56 = por %p54, %p55
    %p57 = scmp.ne.s32.totalorder %s49, %s51
    %p58 = scmp.eq.s32.totalorder %s20, 1
    %p59 = por %p57, %p58
    %p60 = scmp.ne.s32.totalorder %s51, %s52
    %p61 = scmp.eq.s32.totalorder %s20, 0
    %p62 = por %p60, %p61
    %p63 = scmp.ne.s32.totalorder %s51, %s52
    %p64 = scmp.eq.s32.totalorder %s21, 1
    %p65 = por %p63, %p64
    %p67 = scmp.ne.s32.totalorder %s52, %s66
    %p68 = scmp.eq.s32.totalorder %s21, 0
    %p69 = por %p67, %p68
    %s71 = sadd.s32 %s70, 1
    %p74 = scmp.eq.s32.totalorder %s15, 1
    %p75 = scmp.ne.s32.totalorder %s70, %s72
    %p76 = scmp.eq.s32.totalorder %s15, 0
    %p77 = por %p75, %p76
    %p78 = scmp.ne.s32.totalorder %s70, %s72
    %p79 = scmp.eq.s32.totalorder %s20, 1
    %p80 = por %p78, %p79
    %p81 = scmp.ne.s32.totalorder %s72, %s73
    %p82 = scmp.eq.s32.totalorder %s20, 0
    %p83 = por %p81, %p82
    %p84 = scmp.ne.s32.totalorder %s72, %s73
    %p85 = scmp.eq.s32.totalorder %s21, 1
    %p86 = por %p84, %p85
    %p88 = scmp.ne.s32.totalorder %s73, %s87
    %p89 = scmp.eq.s32.totalorder %s21, 0
    %p90 = por %p88, %p89
    %s92 = sadd.s32 %s91, 1
    %p95 = scmp.eq.s32.totalorder %s15, 1
    %p96 = scmp.ne.s32.totalorder %s91, %s93
    %p97 = scmp.eq.s32.totalorder %s15, 0
    %p98 = por %p96, %p97
    %p99 = scmp.ne.s32.totalorder %s91, %s93
    %p100 = scmp.eq.s32.totalorder %s20, 1
    %p101 = por %p99, %p100
    %p102 = scmp.ne.s32.totalorder %s93, %s94
    %p103 = scmp.eq.s32.totalorder %s20, 0
    %p104 = por %p102, %p103
    %p105 = scmp.ne.s32.totalorder %s93, %s94
    %p106 = scmp.eq.s32.totalorder %s21, 1
    %p107 = por %p105, %p106
    %p109 = scmp.ne.s32.totalorder %s94, %s108
    %p110 = scmp.eq.s32.totalorder %s21, 0
    %p111 = por %p109, %p110
    %s113 = sadd.s32 %s112, 1
    %p116 = scmp.eq.s32.totalorder %s15, 1
    %p117 = scmp.ne.s32.totalorder %s112, %s114
    %p118 = scmp.eq.s32.totalorder %s15, 0
    %p119 = por %p117, %p118
    %p120 = scmp.ne.s32.totalorder %s112, %s114
    %p121 = scmp.eq.s32.totalorder %s20, 1
    %p122 = por %p120, %p121
    %p123 = scmp.ne.s32.totalorder %s114, %s115
    %p124 = scmp.eq.s32.totalorder %s20, 0
    %p125 = por %p123, %p124
    %p126 = scmp.ne.s32.totalorder %s114, %s115
    %p127 = scmp.eq.s32.totalorder %s21, 1
    %p128 = por %p126, %p127
    %p130 = scmp.ne.s32.totalorder %s115, %s129
    %p131 = scmp.eq.s32.totalorder %s21, 0
    %p132 = por %p130, %p131
    %s134 = sadd.s32 %s133, 1
    %p137 = scmp.eq.s32.totalorder %s15, 1
    %p138 = scmp.ne.s32.totalorder %s133, %s135
    %p139 = scmp.eq.s32.totalorder %s15, 0
    %p140 = por %p138, %p139
    %p141 = scmp.ne.s32.totalorder %s133, %s135
    %p142 = scmp.eq.s32.totalorder %s20, 1
    %p143 = por %p141, %p142
    %p144 = scmp.ne.s32.totalorder %s135, %s136
    %p145 = scmp.eq.s32.totalorder %s20, 0
    %p146 = por %p144, %p145
    %p147 = scmp.ne.s32.totalorder %s135, %s136
    %p148 = scmp.eq.s32.totalorder %s21, 1
    %p149 = por %p147, %p148
    %p151 = scmp.ne.s32.totalorder %s136, %s150
    %p152 = scmp.eq.s32.totalorder %s21, 0
    %p153 = por %p151, %p152
    %s155 = sadd.s32 %s154, 1
    %p158 = scmp.eq.s32.totalorder %s15, 1
    %p159 = scmp.ne.s32.totalorder %s154, %s156
    %p160 = scmp.eq.s32.totalorder %s15, 0
    %p161 = por %p159, %p160
    %p162 = scmp.ne.s32.totalorder %s154, %s156
    %p163 = scmp.eq.s32.totalorder %s20, 1
    %p164 = por %p162, %p163
    %p165 = scmp.ne.s32.totalorder %s156, %s157
    %p166 = scmp.eq.s32.totalorder %s20, 0
    %p167 = por %p165, %p166
    %p168 = scmp.ne.s32.totalorder %s156, %s157
    %p169 = scmp.eq.s32.totalorder %s21, 1
    %p170 = por %p168, %p169
    %p172 = scmp.ne.s32.totalorder %s157, %s171
    %p173 = scmp.eq.s32.totalorder %s21, 0
    %p174 = por %p172, %p173
    %s176 = sadd.s32 %s175, 1
    %p179 = scmp.eq.s32.totalorder %s15, 1
    %p180 = scmp.ne.s32.totalorder %s175, %s177
    %p181 = scmp.eq.s32.totalorder %s15, 0
    %p182 = por %p180, %p181
    %p183 = scmp.ne.s32.totalorder %s175, %s177
    %p184 = scmp.eq.s32.totalorder %s20, 1
    %p185 = por %p183, %p184
    %p186 = scmp.ne.s32.totalorder %s177, %s178
    %p187 = scmp.eq.s32.totalorder %s20, 0
    %p188 = por %p186, %p187
    %p189 = scmp.ne.s32.totalorder %s177, %s178
    %p190 = scmp.eq.s32.totalorder %s21, 1
    %p191 = por %p189, %p190
    %p193 = scmp.ne.s32.totalorder %s178, %s192
    %p194 = scmp.eq.s32.totalorder %s21, 0
    %p195 = por %p193, %p194
    %s197 = sadd.s32 %s196, 1
    %p200 = scmp.eq.s32.totalorder %s15, 1
    %p201 = scmp.ne.s32.totalorder %s196, %s198
    %p202 = scmp.eq.s32.totalorder %s15, 0
    %p203 = por %p201, %p202
    %p204 = scmp.ne.s32.totalorder %s196, %s198
    %p205 = scmp.eq.s32.totalorder %s20, 1
    %p206 = por %p204, %p205
    %p207 = scmp.ne.s32.totalorder %s198, %s199
    %p208 = scmp.eq.s32.totalorder %s20, 0
    %p209 = por %p207, %p208
    %p210 = scmp.ne.s32.totalorder %s198, %s199
    %p211 = scmp.eq.s32.totalorder %s21, 1
    %p212 = por %p210, %p211
    %p214 = scmp.ne.s32.totalorder %s199, %s213
    %p215 = scmp.eq.s32.totalorder %s21, 0
    %p216 = por %p214, %p215
    %s217 = ssub.s32 %s15, %s22
    %p218 = scmp.eq.s32.totalorder %s217, 0
    %s220 = sadd.s32 %s219, 1
    %s221 = scalar_select %p218, %s219, %s220
    %p224 = pneg %p218
    %p225 = scmp.eq.s32.totalorder %s15, 1
    %p226 = por %p224, %p225
    %p227 = scmp.ne.s32.totalorder %s219, %s222
    %p228 = scmp.eq.s32.totalorder %s15, 0
    %p229 = por %p227, %p228
    %p230 = scmp.ne.s32.totalorder %s219, %s222
    %p231 = scmp.eq.s32.totalorder %s20, 1
    %p232 = por %p230, %p231
    %p233 = scmp.ne.s32.totalorder %s222, %s223
    %p234 = scmp.eq.s32.totalorder %s20, 0
    %p235 = por %p233, %p234
    %p236 = scmp.ne.s32.totalorder %s222, %s223
    %p237 = scmp.eq.s32.totalorder %s21, 1
    %p238 = por %p236, %p237
    %p240 = scmp.ne.s32.totalorder %s223, %s239
    %p241 = scmp.eq.s32.totalorder %s21, 0
    %p242 = por %p240, %p241
    %p243 = scmp.le.s32.totalorder 1, %s15
    %p244 = scmp.lt.s32.totalorder %s15, 3
    %p245 = pnand %p243, %p244
    %p246 = pneg %p245
    // Predicated region
    $region9: #{_dcn_forward_impl.1} parent=5 // pred_check
      _
    $region10: #{_dcn_forward_impl.1} parent=5 // pred_check_branch
      %248 = sbr.rel (%p245) target = $region12
    $region11: #{_dcn_forward_impl.1} parent=5 // pred_region
      %s249 = ssub.s32 %s15, 1
      // Predicated region
      $region13: #{_dcn_forward_impl.1} parent=11 // pred_check
        %p250 = pneg %p62
      $region14: #{_dcn_forward_impl.1} parent=11 // pred_check_branch
        %252 = sbr.rel (%p250) target = $region16
      $region15: #{_dcn_forward_impl.1} parent=11 // pred_region
        _
      $region16: #{_dcn_forward_impl.1} parent=11 // pred_fallthru
        _
      // Predicated region
      $region17: #{_dcn_forward_impl.1} parent=11 // pred_check
        %p253 = pneg %p83
      $region18: #{_dcn_forward_impl.1} parent=11 // pred_check_branch
        %255 = sbr.rel (%p253) target = $region20
      $region19: #{_dcn_forward_impl.1} parent=11 // pred_region
        _
      $region20: #{_dcn_forward_impl.1} parent=11 // pred_fallthru
        _
      // Predicated region
      $region21: #{_dcn_forward_impl.1} parent=11 // pred_check
        %p256 = pneg %p104
      $region22: #{_dcn_forward_impl.1} parent=11 // pred_check_branch
        %258 = sbr.rel (%p256) target = $region24
      $region23: #{_dcn_forward_impl.1} parent=11 // pred_region
        _
      $region24: #{_dcn_forward_impl.1} parent=11 // pred_fallthru
        _
      // Predicated region
      $region25: #{_dcn_forward_impl.1} parent=11 // pred_check
        %p259 = pneg %p125
      $region26: #{_dcn_forward_impl.1} parent=11 // pred_check_branch
        %261 = sbr.rel (%p259) target = $region28
      $region27: #{_dcn_forward_impl.1} parent=11 // pred_region
        _
      $region28: #{_dcn_forward_impl.1} parent=11 // pred_fallthru
        _
      // Predicated region
      $region29: #{_dcn_forward_impl.1} parent=11 // pred_check
        %p262 = pneg %p146
      $region30: #{_dcn_forward_impl.1} parent=11 // pred_check_branch
        %264 = sbr.rel (%p262) target = $region32
      $region31: #{_dcn_forward_impl.1} parent=11 // pred_region
        _
      $region32: #{_dcn_forward_impl.1} parent=11 // pred_fallthru
        _
      // Predicated region
      $region33: #{_dcn_forward_impl.1} parent=11 // pred_check
        %p265 = pneg %p167
      $region34: #{_dcn_forward_impl.1} parent=11 // pred_check_branch
        %267 = sbr.rel (%p265) target = $region36
      $region35: #{_dcn_forward_impl.1} parent=11 // pred_region
        _
      $region36: #{_dcn_forward_impl.1} parent=11 // pred_fallthru
        _
      // Predicated region
      $region37: #{_dcn_forward_impl.1} parent=11 // pred_check
        %p268 = pneg %p188
      $region38: #{_dcn_forward_impl.1} parent=11 // pred_check_branch
        %270 = sbr.rel (%p268) target = $region40
      $region39: #{_dcn_forward_impl.1} parent=11 // pred_region
        _
      $region40: #{_dcn_forward_impl.1} parent=11 // pred_fallthru
        _
      // Predicated region
      $region41: #{_dcn_forward_impl.1} parent=11 // pred_check
        %p271 = pneg %p209
      $region42: #{_dcn_forward_impl.1} parent=11 // pred_check_branch
        %273 = sbr.rel (%p271) target = $region44
      $region43: #{_dcn_forward_impl.1} parent=11 // pred_region
        _
      $region44: #{_dcn_forward_impl.1} parent=11 // pred_fallthru
        _
    $region12: #{_dcn_forward_impl.1} parent=5 // pred_fallthru
      _
    %p274 = scmp.lt.s32.totalorder %s15, 2
    // Predicated region
    $region45: #{_dcn_forward_impl.1} parent=5 // pred_check
      %p275 = pneg %p274
    $region46: #{_dcn_forward_impl.1} parent=5 // pred_check_branch
      %277 = sbr.rel (%p275) target = $region48
    $region47: #{_dcn_forward_impl.1} parent=5 // pred_region
      // Predicated region
      $region49: #{_dcn_forward_impl.1} parent=47 // pred_check
        %p278 = pneg %p35
      $region50: #{_dcn_forward_impl.1} parent=47 // pred_check_branch
        %280 = sbr.rel (%p278) target = $region52
      $region51: #{_dcn_forward_impl.1} parent=47 // pred_region
        %p281 = scmp.lt.s32.totalorder %s15, 1
        %s282 = scalar_select %p281, %s15, 1
        %s283 = smul.addr %s282, 2
        %s284 = smul.addr %s283, 8
        %s285 = scalar_lea.vmem %s0, %s284
      $region52: #{_dcn_forward_impl.1} parent=47 // pred_fallthru
        _
    $region48: #{_dcn_forward_impl.1} parent=5 // pred_fallthru
      _
    %p286 = scmp.le.s32.totalorder 1, %s15
    %p287 = scmp.lt.s32.totalorder %s15, 3
    %p288 = pnand %p286, %p287
    %p289 = pneg %p288
    // Predicated region
    $region53: #{_dcn_forward_impl.1} parent=5 // pred_check
      _
    $region54: #{_dcn_forward_impl.1} parent=5 // pred_check_branch
      %291 = sbr.rel (%p288) target = $region56
    $region55: #{_dcn_forward_impl.1} parent=5 // pred_region
      %s292 = ssub.s32 %s15, 1
      %p293 = scmp.lt.s32.totalorder %s20, 1
      %s294 = scalar_select %p293, %s20, 1
      %s295 = smul.addr %s294, 2
      %s296 = smul.addr %s295, 8
      %s297 = scalar_lea.vmem %s0, %s296
      %p298 = pneg %p41
      %p299 = pneg %p38
      %p300 = pneg %p62
      %p301 = pneg %p59
      %p302 = pneg %p83
      %p303 = pneg %p80
      %p304 = pneg %p104
      %p305 = pneg %p101
      %p306 = pneg %p125
      %p307 = pneg %p122
      %p308 = pneg %p146
      %p309 = pneg %p143
      %p310 = pneg %p167
      %p311 = pneg %p164
      %p312 = pneg %p188
      %p313 = pneg %p185
      %p314 = pneg %p209
      %p315 = pneg %p206
      %p316 = pneg %p235
      %p317 = pneg %p232
      %p318 = scmp.lt.s32.totalorder %s20, 1
      %s319 = scalar_select %p318, %s20, 1
      %s320 = smul.addr %s319, 2
      %s321 = smul.addr %s320, 8
      %s322 = scalar_lea.vmem %s9, %s321
      %p323 = scmp.lt.s32.totalorder %s20, 1
      %s324 = scalar_select %p323, %s20, 1
      %s325 = smul.addr %s324, 2
      %s326 = smul.addr %s325, 8
      %s327 = scalar_lea.vmem %s0, %s326
      %p328 = scmp.lt.s32.totalorder %s20, 1
      %s329 = scalar_select %p328, %s20, 1
      %s330 = smul.addr %s329, 2
      %s331 = smul.addr %s330, 8
      %s332 = scalar_lea.vmem %s9, %s331
      %vm333 = vcmask 654336
      %334 = vst.msk [vmem:[#allocation2] sm:$0xff] %vm333, 0.0
      %335 = vst.msk [vmem:[#allocation2 + $0x8] sm:$0xff] %vm333, 0.0
      %vm336 = vcmask 650240
      %337 = vst.msk [vmem:[#allocation2 + $0x10] sm:$0xf] %vm336, 0.0
      %v338 = vld [vmem:[%s327] sm:$0xff]
      %v339 = vld [vmem:[%s327 + $0x8] sm:$0xff]
      %342 = vrot.lane.b32.xlu0 %v338, 8
      %v343 = vpop.permute.xlu0 %342
      %344 = vrot.lane.b32.xlu0 %v339, 8
      %v345 = vpop.permute.xlu0 %344
      %vm348 = vcmask 588864
      %349 = vst.msk [vmem:[#allocation2 + $0x2] sm:$0xff] %vm348, %v343
      %350 = vst.msk [vmem:[#allocation2 + $0xa] sm:$0xff] %vm348, %v345
      %v351 = vld [vmem:[#allocation2] sm:$0xff]
      %v352 = vld [vmem:[#allocation2 + $0x8] sm:$0xff]
      %v353 = vld [vmem:[%s1] sm:$0xff]
      %v354 = vld [vmem:[%s1 + $0x8] sm:$0xff]
      %v355 = vld [vmem:[%s1 + $0x10] sm:$0xff]
      %v356 = vld [vmem:[%s1 + $0x18] sm:$0xff]
      %v357 = vld [vmem:[%s1 + $0x20] sm:$0xff]
      %v358 = vld [vmem:[%s1 + $0x28] sm:$0xff]
      %v359 = vld [vmem:[%s1 + $0x30] sm:$0xff]
      %v360 = vld [vmem:[%s1 + $0x38] sm:$0xff]
      %v361 = vld [vmem:[%s1 + $0x40] sm:$0xff]
      %v362 = vld [vmem:[%s1 + $0x48] sm:$0xff]
      %v363 = vld [vmem:[#allocation2 + $0x1] sm:$0xff]
      %v364 = vld [vmem:[#allocation2 + $0x9] sm:$0xff]
      %s365 = scalar_lea.vmem %s1, 80
      %v366 = vld [vmem:[%s365] sm:$0xff]
      %v367 = vld [vmem:[%s365 + $0x8] sm:$0xff]
      %v368 = vld [vmem:[%s365 + $0x10] sm:$0xff]
      %v369 = vld [vmem:[%s365 + $0x18] sm:$0xff]
      %v370 = vld [vmem:[%s365 + $0x20] sm:$0xff]
      %v371 = vld [vmem:[%s365 + $0x28] sm:$0xff]
      %v372 = vld [vmem:[%s365 + $0x30] sm:$0xff]
      %v373 = vld [vmem:[%s365 + $0x38] sm:$0xff]
      %v374 = vld [vmem:[%s365 + $0x40] sm:$0xff]
      %v375 = vld [vmem:[%s365 + $0x48] sm:$0xff]
      %v377 = vsel %vm333, %v363, 0
      %v380 = vsel %vm333, %v364, 0
      %382 = vmatprep.subr.mxu0 0.0
      %383 = vmatpush1.msra.mxu0 %v366
      %384 = vmatprep.subr.mxu0 0.0
      %385 = vmatpush1.msra.mxu0 %v367
      %386 = vmatprep.subr.mxu0 0.0
      %387 = vmatpush1.msra.mxu0 %v368
      %388 = vmatprep.subr.mxu0 0.0
      %389 = vmatpush1.msra.mxu0 %v369
      %390 = vmatprep.subr.mxu0 0.0
      %391 = vmatpush1.msra.mxu0 %v370
      %392 = vmatprep.subr.mxu0 0.0
      %393 = vmatpush1.msra.mxu0 %v371
      %394 = vmatprep.subr.mxu0 0.0
      %395 = vmatpush1.msra.mxu0 %v372
      %396 = vmatprep.subr.mxu0 0.0
      %397 = vmatpush1.msra.mxu0 %v373
      %398 = vmatprep.subr.mxu0 0.0
      %399 = vmatpush1.msra.mxu0 %v374
      %400 = vmatprep.subr.mxu0 0.0
      %401 = vmatpush1.msra.mxu0 %v375
      %402 = vmatprep.subr.mxu0 0.0
      %403 = vmatpush1.msra.mxu0 0.0
      %404 = vmatprep.subr.mxu0 0.0
      %405 = vmatpush1.msra.mxu0 0.0
      %406 = vmatprep.subr.mxu0 0.0
      %407 = vmatpush1.msra.mxu0 0.0
      %408 = vmatprep.subr.mxu0 0.0
      %409 = vmatpush1.msra.mxu0 0.0
      %410 = vmatprep.subr.mxu0 0.0
      %411 = vmatpush1.msra.mxu0 0.0
      %412 = vmatprep.subr.mxu0 0.0
      %413 = vmatpush1.msra.mxu0 0.0
      %414 = vmatprep.subr.mxu0 0.0
      %415 = vmatpush1.msra.mxu0 0.0
      %416 = vmatprep.subr.mxu0 0.0
      %417 = vmatpush1.msra.mxu0 0.0
      %418 = vmatprep.subr.mxu0 0.0
      %419 = vmatpush1.msra.mxu0 0.0
      %420 = vmatprep.subr.mxu0 0.0
      %421 = vmatpush1.msra.mxu0 0.0
      %422 = vmatprep.subr.mxu0 0.0
      %423 = vmatpush1.msra.mxu0 0.0
      %424 = vmatprep.subr.mxu0 0.0
      %425 = vmatpush1.msra.mxu0 0.0
      %426 = vmatprep.subr.mxu0 0.0
      %427 = vmatpush1.msra.mxu0 0.0
      %428 = vmatprep.subr.mxu0 0.0
      %429 = vmatpush1.msra.mxu0 0.0
      %430 = vmatprep.subr.mxu0 0.0
      %431 = vmatpush1.msra.mxu0 0.0
      %432 = vmatprep.subr.mxu0 0.0
      %433 = vmatpush1.msra.mxu0 0.0
      %434 = vmatprep.subr.mxu0 0.0
      %435 = vmatpush1.msra.mxu0 0.0
      %436 = vmatprep.subr.mxu0 0.0
      %437 = vmatpush1.msra.mxu0 0.0
      %438 = vmatprep.subr.mxu0 0.0
      %439 = vmatpush1.msra.mxu0 0.0
      %440 = vmatprep.subr.mxu0 0.0
      %441 = vmatpush1.msra.mxu0 0.0
      %442 = vmatprep.subr.mxu0 0.0
      %443 = vmatpush1.msra.mxu0 0.0
      %444 = vmatprep.subr.mxu0 0.0
      %445 = vmatpush1.msra.mxu0 0.0
      %446 = vmatprep.mubr.f32.mxu0 0.0
      %447 = vmatmul.mubr.f32.gmra.mrb[0].mxu0 %v377
      %v448 = vpop.f32.mrb[0].mxu0
      %v449 = vadd.f32 0.0, %v448
      %v450 = vpop.f32.mrb[0].mxu0
      %451 = vmatprep.mubr.f32.mxu0 0.0
      %452 = vmatmul.mubr.f32.gmra.mrb[0].mxu0 %v380
      %v453 = vpop.f32.mrb[0].mxu0
      %v454 = vadd.f32 0.0, %v453
      %v455 = vpop.f32.mrb[0].mxu0
      %456 = vdwg.mxu0
      %v458 = vsel %vm333, %v351, 0
      %v461 = vsel %vm333, %v352, 0
      %463 = vmatprep.subr.mxu0 0.0
      %464 = vmatpush1.msra.mxu0 %v353
      %465 = vmatprep.subr.mxu0 0.0
      %466 = vmatpush1.msra.mxu0 %v354
      %467 = vmatprep.subr.mxu0 0.0
      %468 = vmatpush1.msra.mxu0 %v355
      %469 = vmatprep.subr.mxu0 0.0
      %470 = vmatpush1.msra.mxu0 %v356
      %471 = vmatprep.subr.mxu0 0.0
      %472 = vmatpush1.msra.mxu0 %v357
      %473 = vmatprep.subr.mxu0 0.0
      %474 = vmatpush1.msra.mxu0 %v358
      %475 = vmatprep.subr.mxu0 0.0
      %476 = vmatpush1.msra.mxu0 %v359
      %477 = vmatprep.subr.mxu0 0.0
      %478 = vmatpush1.msra.mxu0 %v360
      %479 = vmatprep.subr.mxu0 0.0
      %480 = vmatpush1.msra.mxu0 %v361
      %481 = vmatprep.subr.mxu0 0.0
      %482 = vmatpush1.msra.mxu0 %v362
      %483 = vmatprep.subr.mxu0 0.0
      %484 = vmatpush1.msra.mxu0 0.0
      %485 = vmatprep.subr.mxu0 0.0
      %486 = vmatpush1.msra.mxu0 0.0
      %487 = vmatprep.subr.mxu0 0.0
      %488 = vmatpush1.msra.mxu0 0.0
      %489 = vmatprep.subr.mxu0 0.0
      %490 = vmatpush1.msra.mxu0 0.0
      %491 = vmatprep.subr.mxu0 0.0
      %492 = vmatpush1.msra.mxu0 0.0
      %493 = vmatprep.subr.mxu0 0.0
      %494 = vmatpush1.msra.mxu0 0.0
      %495 = vmatprep.subr.mxu0 0.0
      %496 = vmatpush1.msra.mxu0 0.0
      %497 = vmatprep.subr.mxu0 0.0
      %498 = vmatpush1.msra.mxu0 0.0
      %499 = vmatprep.subr.mxu0 0.0
      %500 = vmatpush1.msra.mxu0 0.0
      %501 = vmatprep.subr.mxu0 0.0
      %502 = vmatpush1.msra.mxu0 0.0
      %503 = vmatprep.subr.mxu0 0.0
      %504 = vmatpush1.msra.mxu0 0.0
      %505 = vmatprep.subr.mxu0 0.0
      %506 = vmatpush1.msra.mxu0 0.0
      %507 = vmatprep.subr.mxu0 0.0
      %508 = vmatpush1.msra.mxu0 0.0
      %509 = vmatprep.subr.mxu0 0.0
      %510 = vmatpush1.msra.mxu0 0.0
      %511 = vmatprep.subr.mxu0 0.0
      %512 = vmatpush1.msra.mxu0 0.0
      %513 = vmatprep.subr.mxu0 0.0
      %514 = vmatpush1.msra.mxu0 0.0
      %515 = vmatprep.subr.mxu0 0.0
      %516 = vmatpush1.msra.mxu0 0.0
      %517 = vmatprep.subr.mxu0 0.0
      %518 = vmatpush1.msra.mxu0 0.0
      %519 = vmatprep.subr.mxu0 0.0
      %520 = vmatpush1.msra.mxu0 0.0
      %521 = vmatprep.subr.mxu0 0.0
      %522 = vmatpush1.msra.mxu0 0.0
      %523 = vmatprep.subr.mxu0 0.0
      %524 = vmatpush1.msra.mxu0 0.0
      %525 = vmatprep.subr.mxu0 0.0
      %526 = vmatpush1.msra.mxu0 0.0
      %527 = vmatprep.mubr.f32.mxu0 0.0
      %528 = vmatmul.mubr.f32.gmra.mrb[0].mxu0 %v458
      %v529 = vpop.f32.mrb[0].mxu0
      %v530 = vadd.f32 %v449, %v529
      %v531 = vpop.f32.mrb[0].mxu0
      %532 = vmatprep.mubr.f32.mxu0 0.0
      %533 = vmatmul.mubr.f32.gmra.mrb[0].mxu0 %v461
      %v534 = vpop.f32.mrb[0].mxu0
      %v535 = vadd.f32 %v454, %v534
      %v536 = vpop.f32.mrb[0].mxu0
      %537 = vdwg.mxu0
      %v538 = vld [vmem:[#allocation2 + $0x2] sm:$0xff]
      %v539 = vld [vmem:[#allocation2 + $0xa] sm:$0xff]
      %s540 = scalar_lea.vmem %s1, 160
      %v541 = vld [vmem:[%s540] sm:$0xff]
      %v542 = vld [vmem:[%s540 + $0x8] sm:$0xff]
      %v543 = vld [vmem:[%s540 + $0x10] sm:$0xff]
      %v544 = vld [vmem:[%s540 + $0x18] sm:$0xff]
      %v545 = vld [vmem:[%s540 + $0x20] sm:$0xff]
      %v546 = vld [vmem:[%s540 + $0x28] sm:$0xff]
      %v547 = vld [vmem:[%s540 + $0x30] sm:$0xff]
      %v548 = vld [vmem:[%s540 + $0x38] sm:$0xff]
      %v549 = vld [vmem:[%s540 + $0x40] sm:$0xff]
      %v550 = vld [vmem:[%s540 + $0x48] sm:$0xff]
      %v552 = vsel %vm333, %v538, 0
      %v555 = vsel %vm333, %v539, 0
      %557 = vmatprep.subr.mxu0 0.0
      %558 = vmatpush1.msra.mxu0 %v541
      %559 = vmatprep.subr.mxu0 0.0
      %560 = vmatpush1.msra.mxu0 %v542
      %561 = vmatprep.subr.mxu0 0.0
      %562 = vmatpush1.msra.mxu0 %v543
      %563 = vmatprep.subr.mxu0 0.0
      %564 = vmatpush1.msra.mxu0 %v544
      %565 = vmatprep.subr.mxu0 0.0
      %566 = vmatpush1.msra.mxu0 %v545
      %567 = vmatprep.subr.mxu0 0.0
      %568 = vmatpush1.msra.mxu0 %v546
      %569 = vmatprep.subr.mxu0 0.0
      %570 = vmatpush1.msra.mxu0 %v547
      %571 = vmatprep.subr.mxu0 0.0
      %572 = vmatpush1.msra.mxu0 %v548
      %573 = vmatprep.subr.mxu0 0.0
      %574 = vmatpush1.msra.mxu0 %v549
      %575 = vmatprep.subr.mxu0 0.0
      %576 = vmatpush1.msra.mxu0 %v550
      %577 = vmatprep.subr.mxu0 0.0
      %578 = vmatpush1.msra.mxu0 0.0
      %579 = vmatprep.subr.mxu0 0.0
      %580 = vmatpush1.msra.mxu0 0.0
      %581 = vmatprep.subr.mxu0 0.0
      %582 = vmatpush1.msra.mxu0 0.0
      %583 = vmatprep.subr.mxu0 0.0
      %584 = vmatpush1.msra.mxu0 0.0
      %585 = vmatprep.subr.mxu0 0.0
      %586 = vmatpush1.msra.mxu0 0.0
      %587 = vmatprep.subr.mxu0 0.0
      %588 = vmatpush1.msra.mxu0 0.0
      %589 = vmatprep.subr.mxu0 0.0
      %590 = vmatpush1.msra.mxu0 0.0
      %591 = vmatprep.subr.mxu0 0.0
      %592 = vmatpush1.msra.mxu0 0.0
      %593 = vmatprep.subr.mxu0 0.0
      %594 = vmatpush1.msra.mxu0 0.0
      %595 = vmatprep.subr.mxu0 0.0
      %596 = vmatpush1.msra.mxu0 0.0
      %597 = vmatprep.subr.mxu0 0.0
      %598 = vmatpush1.msra.mxu0 0.0
      %599 = vmatprep.subr.mxu0 0.0
      %600 = vmatpush1.msra.mxu0 0.0
      %601 = vmatprep.subr.mxu0 0.0
      %602 = vmatpush1.msra.mxu0 0.0
      %603 = vmatprep.subr.mxu0 0.0
      %604 = vmatpush1.msra.mxu0 0.0
      %605 = vmatprep.subr.mxu0 0.0
      %606 = vmatpush1.msra.mxu0 0.0
      %607 = vmatprep.subr.mxu0 0.0
      %608 = vmatpush1.msra.mxu0 0.0
      %609 = vmatprep.subr.mxu0 0.0
      %610 = vmatpush1.msra.mxu0 0.0
      %611 = vmatprep.subr.mxu0 0.0
      %612 = vmatpush1.msra.mxu0 0.0
      %613 = vmatprep.subr.mxu0 0.0
      %614 = vmatpush1.msra.mxu0 0.0
      %615 = vmatprep.subr.mxu0 0.0
      %616 = vmatpush1.msra.mxu0 0.0
      %617 = vmatprep.subr.mxu0 0.0
      %618 = vmatpush1.msra.mxu0 0.0
      %619 = vmatprep.subr.mxu0 0.0
      %620 = vmatpush1.msra.mxu0 0.0
      %621 = vmatprep.mubr.f32.mxu0 0.0
      %622 = vmatmul.mubr.f32.gmra.mrb[0].mxu0 %v552
      %v623 = vpop.f32.mrb[0].mxu0
      %v624 = vadd.f32 0.0, %v623
      %v625 = vpop.f32.mrb[0].mxu0
      %626 = vmatprep.mubr.f32.mxu0 0.0
      %627 = vmatmul.mubr.f32.gmra.mrb[0].mxu0 %v555
      %v628 = vpop.f32.mrb[0].mxu0
      %v629 = vadd.f32 0.0, %v628
      %v630 = vpop.f32.mrb[0].mxu0
      %631 = vdwg.mxu0
      %v632 = vadd.f32 %v530, %v624
      %v633 = vadd.f32 %v535, %v629
      %v634 = vld [vmem:[#allocation2 + $0x3] sm:$0xff]
      %v635 = vld [vmem:[#allocation2 + $0xb] sm:$0xff]
      %s636 = scalar_lea.vmem %s1, 240
      %v637 = vld [vmem:[%s636] sm:$0xff]
      %v638 = vld [vmem:[%s636 + $0x8] sm:$0xff]
      %v639 = vld [vmem:[%s636 + $0x10] sm:$0xff]
      %v640 = vld [vmem:[%s636 + $0x18] sm:$0xff]
      %v641 = vld [vmem:[%s636 + $0x20] sm:$0xff]
      %v642 = vld [vmem:[%s636 + $0x28] sm:$0xff]
      %v643 = vld [vmem:[%s636 + $0x30] sm:$0xff]
      %v644 = vld [vmem:[%s636 + $0x38] sm:$0xff]
      %v645 = vld [vmem:[%s636 + $0x40] sm:$0xff]
      %v646 = vld [vmem:[%s636 + $0x48] sm:$0xff]
      %v648 = vsel %vm333, %v634, 0
      %v651 = vsel %vm333, %v635, 0
      %653 = vmatprep.subr.mxu0 0.0
      %654 = vmatpush1.msra.mxu0 %v637
      %655 = vmatprep.subr.mxu0 0.0
      %656 = vmatpush1.msra.mxu0 %v638
      %657 = vmatprep.subr.mxu0 0.0
      %658 = vmatpush1.msra.mxu0 %v639
      %659 = vmatprep.subr.mxu0 0.0
      %660 = vmatpush1.msra.mxu0 %v640
      %661 = vmatprep.subr.mxu0 0.0
      %662 = vmatpush1.msra.mxu0 %v641
      %663 = vmatprep.subr.mxu0 0.0
      %664 = vmatpush1.msra.mxu0 %v642
      %665 = vmatprep.subr.mxu0 0.0
      %666 = vmatpush1.msra.mxu0 %v643
      %667 = vmatprep.subr.mxu0 0.0
      %668 = vmatpush1.msra.mxu0 %v644
      %669 = vmatprep.subr.mxu0 0.0
      %670 = vmatpush1.msra.mxu0 %v645
      %671 = vmatprep.subr.mxu0 0.0
      %672 = vmatpush1.msra.mxu0 %v646
      %673 = vmatprep.subr.mxu0 0.0
      %674 = vmatpush1.msra.mxu0 0.0
      %675 = vmatprep.subr.mxu0 0.0
      %676 = vmatpush1.msra.mxu0 0.0
      %677 = vmatprep.subr.mxu0 0.0
      %678 = vmatpush1.msra.mxu0 0.0
      %679 = vmatprep.subr.mxu0 0.0
      %680 = vmatpush1.msra.mxu0 0.0
      %681 = vmatprep.subr.mxu0 0.0
      %682 = vmatpush1.msra.mxu0 0.0
      %683 = vmatprep.subr.mxu0 0.0
      %684 = vmatpush1.msra.mxu0 0.0
      %685 = vmatprep.subr.mxu0 0.0
      %686 = vmatpush1.msra.mxu0 0.0
      %687 = vmatprep.subr.mxu0 0.0
      %688 = vmatpush1.msra.mxu0 0.0
      %689 = vmatprep.subr.mxu0 0.0
      %690 = vmatpush1.msra.mxu0 0.0
      %691 = vmatprep.subr.mxu0 0.0
      %692 = vmatpush1.msra.mxu0 0.0
      %693 = vmatprep.subr.mxu0 0.0
      %694 = vmatpush1.msra.mxu0 0.0
      %695 = vmatprep.subr.mxu0 0.0
      %696 = vmatpush1.msra.mxu0 0.0
      %697 = vmatprep.subr.mxu0 0.0
      %698 = vmatpush1.msra.mxu0 0.0
      %699 = vmatprep.subr.mxu0 0.0
      %700 = vmatpush1.msra.mxu0 0.0
      %701 = vmatprep.subr.mxu0 0.0
      %702 = vmatpush1.msra.mxu0 0.0
      %703 = vmatprep.subr.mxu0 0.0
      %704 = vmatpush1.msra.mxu0 0.0
      %705 = vmatprep.subr.mxu0 0.0
      %706 = vmatpush1.msra.mxu0 0.0
      %707 = vmatprep.subr.mxu0 0.0
      %708 = vmatpush1.msra.mxu0 0.0
      %709 = vmatprep.subr.mxu0 0.0
      %710 = vmatpush1.msra.mxu0 0.0
      %711 = vmatprep.subr.mxu0 0.0
      %712 = vmatpush1.msra.mxu0 0.0
      %713 = vmatprep.subr.mxu0 0.0
      %714 = vmatpush1.msra.mxu0 0.0
      %715 = vmatprep.subr.mxu0 0.0
      %716 = vmatpush1.msra.mxu0 0.0
      %717 = vmatprep.mubr.f32.mxu0 0.0
      %718 = vmatmul.mubr.f32.gmra.mrb[0].mxu0 %v648
      %v719 = vpop.f32.mrb[0].mxu0
      %v720 = vadd.f32 0.0, %v719
      %v721 = vpop.f32.mrb[0].mxu0
      %722 = vmatprep.mubr.f32.mxu0 0.0
      %723 = vmatmul.mubr.f32.gmra.mrb[0].mxu0 %v651
      %v724 = vpop.f32.mrb[0].mxu0
      %v725 = vadd.f32 0.0, %v724
      %v726 = vpop.f32.mrb[0].mxu0
      %727 = vdwg.mxu0
      %v728 = vadd.f32 %v632, %v720
      %v729 = vadd.f32 %v633, %v725
      %v730 = vld [vmem:[#allocation2 + $0x4] sm:$0xff]
      %v731 = vld [vmem:[#allocation2 + $0xc] sm:$0xff]
      %s732 = scalar_lea.vmem %s1, 320
      %v733 = vld [vmem:[%s732] sm:$0xff]
      %v734 = vld [vmem:[%s732 + $0x8] sm:$0xff]
      %v735 = vld [vmem:[%s732 + $0x10] sm:$0xff]
      %v736 = vld [vmem:[%s732 + $0x18] sm:$0xff]
      %v737 = vld [vmem:[%s732 + $0x20] sm:$0xff]
      %v738 = vld [vmem:[%s732 + $0x28] sm:$0xff]
      %v739 = vld [vmem:[%s732 + $0x30] sm:$0xff]
      %v740 = vld [vmem:[%s732 + $0x38] sm:$0xff]
      %v741 = vld [vmem:[%s732 + $0x40] sm:$0xff]
      %v742 = vld [vmem:[%s732 + $0x48] sm:$0xff]
      %v744 = vsel %vm333, %v730, 0
      %v747 = vsel %vm333, %v731, 0
      %749 = vmatprep.subr.mxu0 0.0
      %750 = vmatpush1.msra.mxu0 %v733
      %751 = vmatprep.subr.mxu0 0.0
      %752 = vmatpush1.msra.mxu0 %v734
      %753 = vmatprep.subr.mxu0 0.0
      %754 = vmatpush1.msra.mxu0 %v735
      %755 = vmatprep.subr.mxu0 0.0
      %756 = vmatpush1.msra.mxu0 %v736
      %757 = vmatprep.subr.mxu0 0.0
      %758 = vmatpush1.msra.mxu0 %v737
      %759 = vmatprep.subr.mxu0 0.0
      %760 = vmatpush1.msra.mxu0 %v738
      %761 = vmatprep.subr.mxu0 0.0
      %762 = vmatpush1.msra.mxu0 %v739
      %763 = vmatprep.subr.mxu0 0.0
      %764 = vmatpush1.msra.mxu0 %v740
      %765 = vmatprep.subr.mxu0 0.0
      %766 = vmatpush1.msra.mxu0 %v741
      %767 = vmatprep.subr.mxu0 0.0
      %768 = vmatpush1.msra.mxu0 %v742
      %769 = vmatprep.subr.mxu0 0.0
      %770 = vmatpush1.msra.mxu0 0.0
      %771 = vmatprep.subr.mxu0 0.0
      %772 = vmatpush1.msra.mxu0 0.0
      %773 = vmatprep.subr.mxu0 0.0
      %774 = vmatpush1.msra.mxu0 0.0
      %775 = vmatprep.subr.mxu0 0.0
      %776 = vmatpush1.msra.mxu0 0.0
      %777 = vmatprep.subr.mxu0 0.0
      %778 = vmatpush1.msra.mxu0 0.0
      %779 = vmatprep.subr.mxu0 0.0
      %780 = vmatpush1.msra.mxu0 0.0
      %781 = vmatprep.subr.mxu0 0.0
      %782 = vmatpush1.msra.mxu0 0.0
      %783 = vmatprep.subr.mxu0 0.0
      %784 = vmatpush1.msra.mxu0 0.0
      %785 = vmatprep.subr.mxu0 0.0
      %786 = vmatpush1.msra.mxu0 0.0
      %787 = vmatprep.subr.mxu0 0.0
      %788 = vmatpush1.msra.mxu0 0.0
      %789 = vmatprep.subr.mxu0 0.0
      %790 = vmatpush1.msra.mxu0 0.0
      %791 = vmatprep.subr.mxu0 0.0
      %792 = vmatpush1.msra.mxu0 0.0
      %793 = vmatprep.subr.mxu0 0.0
      %794 = vmatpush1.msra.mxu0 0.0
      %795 = vmatprep.subr.mxu0 0.0
      %796 = vmatpush1.msra.mxu0 0.0
      %797 = vmatprep.subr.mxu0 0.0
      %798 = vmatpush1.msra.mxu0 0.0
      %799 = vmatprep.subr.mxu0 0.0
      %800 = vmatpush1.msra.mxu0 0.0
      %801 = vmatprep.subr.mxu0 0.0
      %802 = vmatpush1.msra.mxu0 0.0
      %803 = vmatprep.subr.mxu0 0.0
      %804 = vmatpush1.msra.mxu0 0.0
      %805 = vmatprep.subr.mxu0 0.0
      %806 = vmatpush1.msra.mxu0 0.0
      %807 = vmatprep.subr.mxu0 0.0
      %808 = vmatpush1.msra.mxu0 0.0
      %809 = vmatprep.subr.mxu0 0.0
      %810 = vmatpush1.msra.mxu0 0.0
      %811 = vmatprep.subr.mxu0 0.0
      %812 = vmatpush1.msra.mxu0 0.0
      %813 = vmatprep.mubr.f32.mxu0 0.0
      %814 = vmatmul.mubr.f32.gmra.mrb[0].mxu0 %v744
      %v815 = vpop.f32.mrb[0].mxu0
      %v816 = vadd.f32 0.0, %v815
      %v817 = vpop.f32.mrb[0].mxu0
      %818 = vmatprep.mubr.f32.mxu0 0.0
      %819 = vmatmul.mubr.f32.gmra.mrb[0].mxu0 %v747
      %v820 = vpop.f32.mrb[0].mxu0
      %v821 = vadd.f32 0.0, %v820
      %v822 = vpop.f32.mrb[0].mxu0
      %823 = vdwg.mxu0
      %v824 = vadd.f32 %v728, %v816
      %v825 = vadd.f32 %v729, %v821
      %v826 = vld [vmem:[%s2] sm:$0x1]
      %v828 = vlaneseq
      %v829 = vshrl.u32 %v828, 7
      %v830 = vsub.s32 0, %v829
      %v831 = vrot.slane %v826, %v830
      %v833 = vadd.f32 %v824, %v831
      %v834 = vadd.f32 %v825, %v831
      %v835 = vmax.f32 %v833, 0.0
      %v836 = vmax.f32 %v834, 0.0
      %837 = vst [vmem:[#allocation3] sm:$0xff] 0.0
      %vm838 = vcmask 261120
      %839 = vst.msk [vmem:[#allocation3 + $0x8] sm:$0xff] %vm838, 0.0
      %840 = vst [vmem:[#allocation3 + $0x10] sm:$0xff] 0.0
      %841 = vst.msk [vmem:[#allocation3 + $0x18] sm:$0xff] %vm838, 0.0
      %842 = vst [vmem:[#allocation3 + $0x20] sm:$0xf] 0.0
      %vm843 = vcmask 257024
      %844 = vst.msk [vmem:[#allocation3 + $0x28] sm:$0xf] %vm843, 0.0
      %vm847 = vcmask 1041408
      %v848 = vrot.slane %v835, 6
      %v849 = vrot.slane %v836, 6
      %v850 = vsel %vm847, %v848, %v849
      %851 = vrot.lane.b32.xlu0 %v848, 16
      %v852 = vpop.permute.xlu0 %851
      %853 = vrot.lane.b32.xlu0 %v850, 16
      %v854 = vpop.permute.xlu0 %853
      %855 = vrot.lane.b32.xlu0 %v849, 16
      %v856 = vpop.permute.xlu0 %855
      %vm860 = vcmask 1047682
      %861 = vst.msk [vmem:[#allocation3] sm:$0xfc] %vm860, %v852
      %vm862 = vcmask 130050
      %863 = vst.msk [vmem:[#allocation3 + $0x8] sm:$0xfc] %vm862, %v852
      %vm864 = vcmask 1047680
      %865 = vst.msk [vmem:[#allocation3 + $0x10] sm:$0xff] %vm864, %v854
      %vm866 = vcmask 130048
      %867 = vst.msk [vmem:[#allocation3 + $0x18] sm:$0xff] %vm866, %v854
      %vm868 = vcmask 1041536
      %869 = vst.msk [vmem:[#allocation3 + $0x20] sm:$0x3] %vm868, %v856
      %vm870 = vcmask 123904
      %871 = vst.msk [vmem:[#allocation3 + $0x28] sm:$0x3] %vm870, %v856
      %v872 = vld [vmem:[#allocation3] sm:$0xfe]
      %v873 = vld [vmem:[#allocation3 + $0x8] sm:$0xfe]
      %v874 = vld [vmem:[#allocation3 + $0x10] sm:$0xff]
      %v875 = vld [vmem:[#allocation3 + $0x18] sm:$0xff]
      %v876 = vld [vmem:[#allocation3 + $0x20] sm:$0x1]
      %v877 = vld [vmem:[#allocation3 + $0x28] sm:$0x1]
      %v878 = vld [vmem:[%s3] sm:$0xff]
      %v879 = vld [vmem:[%s3 + $0x8] sm:$0xff]
      %v880 = vld [vmem:[%s3 + $0x10] sm:$0xff]
      %v881 = vld [vmem:[%s3 + $0x18] sm:$0xff]
      %v882 = vld [vmem:[%s3 + $0x20] sm:$0xff]
      %v883 = vld [vmem:[%s3 + $0x28] sm:$0xff]
      %v884 = vld [vmem:[%s3 + $0x30] sm:$0xff]
      %v885 = vld [vmem:[%s3 + $0x38] sm:$0xff]
      %v886 = vld [vmem:[%s3 + $0x40] sm:$0xff]
      %v887 = vld [vmem:[%s3 + $0x48] sm:$0xff]
      %v888 = vld [vmem:[%s3 + $0x50] sm:$0xff]
      %v889 = vld [vmem:[%s3 + $0x58] sm:$0xff]
      %v890 = vld [vmem:[%s3 + $0x60] sm:$0xff]
      %v891 = vld [vmem:[%s3 + $0x68] sm:$0xff]
      %v892 = vld [vmem:[%s3 + $0x70] sm:$0xff]
      %v893 = vld [vmem:[%s3 + $0x78] sm:$0xff]
      %v894 = vld [vmem:[%s3 + $0x80] sm:$0xff]
      %v895 = vld [vmem:[%s3 + $0x88] sm:$0xff]
      %v896 = vld [vmem:[%s3 + $0x90] sm:$0xff]
      %v897 = vld [vmem:[%s3 + $0x98] sm:$0xff]
      %v898 = vld [vmem:[#allocation3] sm:$0xfc]
      %v899 = vld [vmem:[#allocation3 + $0x8] sm:$0xfc]
      %v900 = vld [vmem:[#allocation3 + $0x20] sm:$0x3]
      %v901 = vld [vmem:[#allocation3 + $0x28] sm:$0x3]
      %s902 = scalar_lea.vmem %s3, 160
      %v903 = vld [vmem:[%s902] sm:$0xff]
      %v904 = vld [vmem:[%s902 + $0x8] sm:$0xff]
      %v905 = vld [vmem:[%s902 + $0x10] sm:$0xff]
      %v906 = vld [vmem:[%s902 + $0x18] sm:$0xff]
      %v907 = vld [vmem:[%s902 + $0x20] sm:$0xff]
      %v908 = vld [vmem:[%s902 + $0x28] sm:$0xff]
      %v909 = vld [vmem:[%s902 + $0x30] sm:$0xff]
      %v910 = vld [vmem:[%s902 + $0x38] sm:$0xff]
      %v911 = vld [vmem:[%s902 + $0x40] sm:$0xff]
      %v912 = vld [vmem:[%s902 + $0x48] sm:$0xff]
      %v913 = vld [vmem:[%s902 + $0x50] sm:$0xff]
      %v914 = vld [vmem:[%s902 + $0x58] sm:$0xff]
      %v915 = vld [vmem:[%s902 + $0x60] sm:$0xff]
      %v916 = vld [vmem:[%s902 + $0x68] sm:$0xff]
      %v917 = vld [vmem:[%s902 + $0x70] sm:$0xff]
      %v918 = vld [vmem:[%s902 + $0x78] sm:$0xff]
      %v919 = vld [vmem:[%s902 + $0x80] sm:$0xff]
      %v920 = vld [vmem:[%s902 + $0x88] sm:$0xff]
      %v921 = vld [vmem:[%s902 + $0x90] sm:$0xff]
      %v922 = vld [vmem:[%s902 + $0x98] sm:$0xff]
      %vm929 = vcmask 1045504
      %v930 = vrot.slane %v898, 2
      %v931 = vrot.slane %v874, 2
      %v932 = vsel %vm929, %v930, %v931
      %v933 = vrot.slane %v899, 2
      %v934 = vrot.slane %v875, 2
      %v935 = vsel %vm929, %v933, %v934
      %v936 = vrot.slane %v900, 2
      %v937 = vsel %vm929, %v931, %v936
      %v938 = vrot.slane %v901, 2
      %v939 = vsel %vm929, %v934, %v938
      %v942 = vsel %vm838, %v935, 0
      %v944 = vsel %vm838, %v939, 0
      %946 = vmatprep.subr.mxu0 0.0
      %947 = vmatpush1.msra.mxu0 %v903
      %948 = vmatprep.subr.mxu0 0.0
      %949 = vmatpush1.msra.mxu0 %v904
      %950 = vmatprep.subr.mxu0 0.0
      %951 = vmatpush1.msra.mxu0 %v905
      %952 = vmatprep.subr.mxu0 0.0
      %953 = vmatpush1.msra.mxu0 %v906
      %954 = vmatprep.subr.mxu0 0.0
      %955 = vmatpush1.msra.mxu0 %v907
      %956 = vmatprep.subr.mxu0 0.0
      %957 = vmatpush1.msra.mxu0 %v908
      %958 = vmatprep.subr.mxu0 0.0
      %959 = vmatpush1.msra.mxu0 %v909
      %960 = vmatprep.subr.mxu0 0.0
      %961 = vmatpush1.msra.mxu0 %v910
      %962 = vmatprep.subr.mxu0 0.0
      %963 = vmatpush1.msra.mxu0 %v911
      %964 = vmatprep.subr.mxu0 0.0
      %965 = vmatpush1.msra.mxu0 %v912
      %966 = vmatprep.subr.mxu0 0.0
      %967 = vmatpush1.msra.mxu0 %v913
      %968 = vmatprep.subr.mxu0 0.0
      %969 = vmatpush1.msra.mxu0 %v914
      %970 = vmatprep.subr.mxu0 0.0
      %971 = vmatpush1.msra.mxu0 %v915
      %972 = vmatprep.subr.mxu0 0.0
      %973 = vmatpush1.msra.mxu0 %v916
      %974 = vmatprep.subr.mxu0 0.0
      %975 = vmatpush1.msra.mxu0 %v917
      %976 = vmatprep.subr.mxu0 0.0
      %977 = vmatpush1.msra.mxu0 %v918
      %978 = vmatprep.subr.mxu0 0.0
      %979 = vmatpush1.msra.mxu0 %v919
      %980 = vmatprep.subr.mxu0 0.0
      %981 = vmatpush1.msra.mxu0 %v920
      %982 = vmatprep.subr.mxu0 0.0
      %983 = vmatpush1.msra.mxu0 %v921
      %984 = vmatprep.subr.mxu0 0.0
      %985 = vmatpush1.msra.mxu0 %v922
      %986 = vmatprep.subr.mxu0 0.0
      %987 = vmatpush1.msra.mxu0 0.0
      %988 = vmatprep.subr.mxu0 0.0
      %989 = vmatpush1.msra.mxu0 0.0
      %990 = vmatprep.subr.mxu0 0.0
      %991 = vmatpush1.msra.mxu0 0.0
      %992 = vmatprep.subr.mxu0 0.0
      %993 = vmatpush1.msra.mxu0 0.0
      %994 = vmatprep.subr.mxu0 0.0
      %995 = vmatpush1.msra.mxu0 0.0
      %996 = vmatprep.subr.mxu0 0.0
      %997 = vmatpush1.msra.mxu0 0.0
      %998 = vmatprep.subr.mxu0 0.0
      %999 = vmatpush1.msra.mxu0 0.0
      %1000 = vmatprep.subr.mxu0 0.0
      %1001 = vmatpush1.msra.mxu0 0.0
      %1002 = vmatprep.subr.mxu0 0.0
      %1003 = vmatpush1.msra.mxu0 0.0
      %1004 = vmatprep.subr.mxu0 0.0
      %1005 = vmatpush1.msra.mxu0 0.0
      %1006 = vmatprep.subr.mxu0 0.0
      %1007 = vmatpush1.msra.mxu0 0.0
      %1008 = vmatprep.subr.mxu0 0.0
      %1009 = vmatpush1.msra.mxu0 0.0
      %1010 = vmatprep.mubr.f32.mxu0 %v942
      %1011 = vmatmul.mubr.f32.gmra.mrb[0].mxu0 %v932
      %v1012 = vpop.f32.mrb[0].mxu0
      %v1013 = vadd.f32 0.0, %v1012
      %v1014 = vpop.f32.mrb[0].mxu0
      %1015 = vmatprep.mubr.f32.mxu0 %v944
      %1016 = vmatmul.mubr.f32.gmra.mrb[0].mxu0 %v937
      %v1017 = vpop.f32.mrb[0].mxu0
      %v1018 = vadd.f32 0.0, %v1017
      %v1019 = vpop.f32.mrb[0].mxu0
      %1020 = vdwg.mxu0
      %vm1025 = vcmask 1046528
      %v1026 = vrot.slane %v872, 1
      %v1027 = vrot.slane %v874, 1
      %v1028 = vsel %vm1025, %v1026, %v1027
      %v1029 = vrot.slane %v873, 1
      %v1030 = vrot.slane %v875, 1
      %v1031 = vsel %vm1025, %v1029, %v1030
      %v1032 = vrot.slane %v876, 1
      %v1033 = vsel %vm1025, %v1027, %v1032
      %v1034 = vrot.slane %v877, 1
      %v1035 = vsel %vm1025, %v1030, %v1034
      %v1038 = vsel %vm838, %v1031, 0
      %v1040 = vsel %vm838, %v1035, 0
      %1042 = vmatprep.subr.mxu0 0.0
      %1043 = vmatpush1.msra.mxu0 %v878
      %1044 = vmatprep.subr.mxu0 0.0
      %1045 = vmatpush1.msra.mxu0 %v879
      %1046 = vmatprep.subr.mxu0 0.0
      %1047 = vmatpush1.msra.mxu0 %v880
      %1048 = vmatprep.subr.mxu0 0.0
      %1049 = vmatpush1.msra.mxu0 %v881
      %1050 = vmatprep.subr.mxu0 0.0
      %1051 = vmatpush1.msra.mxu0 %v882
      %1052 = vmatprep.subr.mxu0 0.0
      %1053 = vmatpush1.msra.mxu0 %v883
      %1054 = vmatprep.subr.mxu0 0.0
      %1055 = vmatpush1.msra.mxu0 %v884
      %1056 = vmatprep.subr.mxu0 0.0
      %1057 = vmatpush1.msra.mxu0 %v885
      %1058 = vmatprep.subr.mxu0 0.0
      %1059 = vmatpush1.msra.mxu0 %v886
      %1060 = vmatprep.subr.mxu0 0.0
      %1061 = vmatpush1.msra.mxu0 %v887
      %1062 = vmatprep.subr.mxu0 0.0
      %1063 = vmatpush1.msra.mxu0 %v888
      %1064 = vmatprep.subr.mxu0 0.0
      %1065 = vmatpush1.msra.mxu0 %v889
      %1066 = vmatprep.subr.mxu0 0.0
      %1067 = vmatpush1.msra.mxu0 %v890
      %1068 = vmatprep.subr.mxu0 0.0
      %1069 = vmatpush1.msra.mxu0 %v891
      %1070 = vmatprep.subr.mxu0 0.0
      %1071 = vmatpush1.msra.mxu0 %v892
      %1072 = vmatprep.subr.mxu0 0.0
      %1073 = vmatpush1.msra.mxu0 %v893
      %1074 = vmatprep.subr.mxu0 0.0
      %1075 = vmatpush1.msra.mxu0 %v894
      %1076 = vmatprep.subr.mxu0 0.0
      %1077 = vmatpush1.msra.mxu0 %v895
      %1078 = vmatprep.subr.mxu0 0.0
      %1079 = vmatpush1.msra.mxu0 %v896
      %1080 = vmatprep.subr.mxu0 0.0
      %1081 = vmatpush1.msra.mxu0 %v897
      %1082 = vmatprep.subr.mxu0 0.0
      %1083 = vmatpush1.msra.mxu0 0.0
      %1084 = vmatprep.subr.mxu0 0.0
      %1085 = vmatpush1.msra.mxu0 0.0
      %1086 = vmatprep.subr.mxu0 0.0
      %1087 = vmatpush1.msra.mxu0 0.0
      %1088 = vmatprep.subr.mxu0 0.0
      %1089 = vmatpush1.msra.mxu0 0.0
      %1090 = vmatprep.subr.mxu0 0.0
      %1091 = vmatpush1.msra.mxu0 0.0
      %1092 = vmatprep.subr.mxu0 0.0
      %1093 = vmatpush1.msra.mxu0 0.0
      %1094 = vmatprep.subr.mxu0 0.0
      %1095 = vmatpush1.msra.mxu0 0.0
      %1096 = vmatprep.subr.mxu0 0.0
      %1097 = vmatpush1.msra.mxu0 0.0
      %1098 = vmatprep.subr.mxu0 0.0
      %1099 = vmatpush1.msra.mxu0 0.0
      %1100 = vmatprep.subr.mxu0 0.0
      %1101 = vmatpush1.msra.mxu0 0.0
      %1102 = vmatprep.subr.mxu0 0.0
      %1103 = vmatpush1.msra.mxu0 0.0
      %1104 = vmatprep.subr.mxu0 0.0
      %1105 = vmatpush1.msra.mxu0 0.0
      %1106 = vmatprep.mubr.f32.mxu0 %v1038
      %1107 = vmatmul.mubr.f32.gmra.mrb[0].mxu0 %v1028
      %v1108 = vpop.f32.mrb[0].mxu0
      %v1109 = vadd.f32 %v1013, %v1108
      %v1110 = vpop.f32.mrb[0].mxu0
      %1111 = vmatprep.mubr.f32.mxu0 %v1040
      %1112 = vmatmul.mubr.f32.gmra.mrb[0].mxu0 %v1033
      %v1113 = vpop.f32.mrb[0].mxu0
      %v1114 = vadd.f32 %v1018, %v1113
      %v1115 = vpop.f32.mrb[0].mxu0
      %1116 = vdwg.mxu0
      %v1117 = vld [vmem:[#allocation3] sm:$0xf8]
      %v1118 = vld [vmem:[#allocation3 + $0x8] sm:$0xf8]
      %v1119 = vld [vmem:[#allocation3 + $0x20] sm:$0x7]
      %v1120 = vld [vmem:[#allocation3 + $0x28] sm:$0x7]
      %s1121 = scalar_lea.vmem %s3, 320
      %v1122 = vld [vmem:[%s1121] sm:$0xff]
      %v1123 = vld [vmem:[%s1121 + $0x8] sm:$0xff]
      %v1124 = vld [vmem:[%s1121 + $0x10] sm:$0xff]
      %v1125 = vld [vmem:[%s1121 + $0x18] sm:$0xff]
      %v1126 = vld [vmem:[%s1121 + $0x20] sm:$0xff]
      %v1127 = vld [vmem:[%s1121 + $0x28] sm:$0xff]
      %v1128 = vld [vmem:[%s1121 + $0x30] sm:$0xff]
      %v1129 = vld [vmem:[%s1121 + $0x38] sm:$0xff]
      %v1130 = vld [vmem:[%s1121 + $0x40] sm:$0xff]
      %v1131 = vld [vmem:[%s1121 + $0x48] sm:$0xff]
      %v1132 = vld [vmem:[%s1121 + $0x50] sm:$0xff]
      %v1133 = vld [vmem:[%s1121 + $0x58] sm:$0xff]
      %v1134 = vld [vmem:[%s1121 + $0x60] sm:$0xff]
      %v1135 = vld [vmem:[%s1121 + $0x68] sm:$0xff]
      %v1136 = vld [vmem:[%s1121 + $0x70] sm:$0xff]
      %v1137 = vld [vmem:[%s1121 + $0x78] sm:$0xff]
      %v1138 = vld [vmem:[%s1121 + $0x80] sm:$0xff]
      %v1139 = vld [vmem:[%s1121 + $0x88] sm:$0xff]
      %v1140 = vld [vmem:[%s1121 + $0x90] sm:$0xff]
      %v1141 = vld [vmem:[%s1121 + $0x98] sm:$0xff]
      %vm1146 = vcmask 1044480
      %v1147 = vrot.slane %v1117, 3
      %v1148 = vrot.slane %v874, 3
      %v1149 = vsel %vm1146, %v1147, %v1148
      %v1150 = vrot.slane %v1118, 3
      %v1151 = vrot.slane %v875, 3
      %v1152 = vsel %vm1146, %v1150, %v1151
      %v1153 = vrot.slane %v1119, 3
      %v1154 = vsel %vm1146, %v1148, %v1153
      %v1155 = vrot.slane %v1120, 3
      %v1156 = vsel %vm1146, %v1151, %v1155
      %v1159 = vsel %vm838, %v1152, 0
      %v1161 = vsel %vm838, %v1156, 0
      %1163 = vmatprep.subr.mxu0 0.0
      %1164 = vmatpush1.msra.mxu0 %v1122
      %1165 = vmatprep.subr.mxu0 0.0
      %1166 = vmatpush1.msra.mxu0 %v1123
      %1167 = vmatprep.subr.mxu0 0.0
      %1168 = vmatpush1.msra.mxu0 %v1124
      %1169 = vmatprep.subr.mxu0 0.0
      %1170 = vmatpush1.msra.mxu0 %v1125
      %1171 = vmatprep.subr.mxu0 0.0
      %1172 = vmatpush1.msra.mxu0 %v1126
      %1173 = vmatprep.subr.mxu0 0.0
      %1174 = vmatpush1.msra.mxu0 %v1127
      %1175 = vmatprep.subr.mxu0 0.0
      %1176 = vmatpush1.msra.mxu0 %v1128
      %1177 = vmatprep.subr.mxu0 0.0
      %1178 = vmatpush1.msra.mxu0 %v1129
      %1179 = vmatprep.subr.mxu0 0.0
      %1180 = vmatpush1.msra.mxu0 %v1130
      %1181 = vmatprep.subr.mxu0 0.0
      %1182 = vmatpush1.msra.mxu0 %v1131
      %1183 = vmatprep.subr.mxu0 0.0
      %1184 = vmatpush1.msra.mxu0 %v1132
      %1185 = vmatprep.subr.mxu0 0.0
      %1186 = vmatpush1.msra.mxu0 %v1133
      %1187 = vmatprep.subr.mxu0 0.0
      %1188 = vmatpush1.msra.mxu0 %v1134
      %1189 = vmatprep.subr.mxu0 0.0
      %1190 = vmatpush1.msra.mxu0 %v1135
      %1191 = vmatprep.subr.mxu0 0.0
      %1192 = vmatpush1.msra.mxu0 %v1136
      %1193 = vmatprep.subr.mxu0 0.0
      %1194 = vmatpush1.msra.mxu0 %v1137
      %1195 = vmatprep.subr.mxu0 0.0
      %1196 = vmatpush1.msra.mxu0 %v1138
      %1197 = vmatprep.subr.mxu0 0.0
      %1198 = vmatpush1.msra.mxu0 %v1139
      %1199 = vmatprep.subr.mxu0 0.0
      %1200 = vmatpush1.msra.mxu0 %v1140
      %1201 = vmatprep.subr.mxu0 0.0
      %1202 = vmatpush1.msra.mxu0 %v1141
      %1203 = vmatprep.subr.mxu0 0.0
      %1204 = vmatpush1.msra.mxu0 0.0
      %1205 = vmatprep.subr.mxu0 0.0
      %1206 = vmatpush1.msra.mxu0 0.0
      %1207 = vmatprep.subr.mxu0 0.0
      %1208 = vmatpush1.msra.mxu0 0.0
      %1209 = vmatprep.subr.mxu0 0.0
      %1210 = vmatpush1.msra.mxu0 0.0
      %1211 = vmatprep.subr.mxu0 0.0
      %1212 = vmatpush1.msra.mxu0 0.0
      %1213 = vmatprep.subr.mxu0 0.0
      %1214 = vmatpush1.msra.mxu0 0.0
      %1215 = vmatprep.subr.mxu0 0.0
      %1216 = vmatpush1.msra.mxu0 0.0
      %1217 = vmatprep.subr.mxu0 0.0
      %1218 = vmatpush1.msra.mxu0 0.0
      %1219 = vmatprep.subr.mxu0 0.0
      %1220 = vmatpush1.msra.mxu0 0.0
      %1221 = vmatprep.subr.mxu0 0.0
      %1222 = vmatpush1.msra.mxu0 0.0
      %1223 = vmatprep.subr.mxu0 0.0
      %1224 = vmatpush1.msra.mxu0 0.0
      %1225 = vmatprep.subr.mxu0 0.0
      %1226 = vmatpush1.msra.mxu0 0.0
      %1227 = vmatprep.mubr.f32.mxu0 %v1159
      %1228 = vmatmul.mubr.f32.gmra.mrb[0].mxu0 %v1149
      %v1229 = vpop.f32.mrb[0].mxu0
      %v1230 = vadd.f32 0.0, %v1229
      %v1231 = vpop.f32.mrb[0].mxu0
      %1232 = vmatprep.mubr.f32.mxu0 %v1161
      %1233 = vmatmul.mubr.f32.gmra.mrb[0].mxu0 %v1154
      %v1234 = vpop.f32.mrb[0].mxu0
      %v1235 = vadd.f32 0.0, %v1234
      %v1236 = vpop.f32.mrb[0].mxu0
      %1237 = vdwg.mxu0
      %v1238 = vadd.f32 %v1109, %v1230
      %v1239 = vadd.f32 %v1114, %v1235
      %v1240 = vld [vmem:[%s4] sm:$0x1]
      %v1242 = vlaneseq
      %v1243 = vshrl.u32 %v1242, 7
      %v1244 = vsub.s32 0, %v1243
      %v1245 = vrot.slane %v1240, %v1244
      %v1247 = vadd.f32 %v1238, %v1245
      %v1248 = vadd.f32 %v1239, %v1245
      %v1249 = vmax.f32 %v1247, 0.0
      %v1250 = vmax.f32 %v1248, 0.0
      %1251 = vst [vmem:[#allocation4] sm:$0xff] 0.0
      %1252 = vst.msk [vmem:[#allocation4 + $0x8] sm:$0xff] %vm838, 0.0
      %1253 = vst [vmem:[#allocation4 + $0x10] sm:$0xff] 0.0
      %1254 = vst.msk [vmem:[#allocation4 + $0x18] sm:$0xff] %vm838, 0.0
      %1255 = vst [vmem:[#allocation4 + $0x20] sm:$0xf] 0.0
      %1256 = vst.msk [vmem:[#allocation4 + $0x28] sm:$0xf] %vm843, 0.0
      %v1259 = vrot.slane %v1249, 6
      %v1260 = vrot.slane %v1250, 6
      %v1261 = vsel %vm847, %v1259, %v1260
      %1262 = vrot.lane.b32.xlu0 %v1259, 16
      %v1263 = vpop.permute.xlu0 %1262
      %1264 = vrot.lane.b32.xlu0 %v1261, 16
      %v1265 = vpop.permute.xlu0 %1264
      %1266 = vrot.lane.b32.xlu0 %v1260, 16
      %v1267 = vpop.permute.xlu0 %1266
      %1271 = vst.msk [vmem:[#allocation4] sm:$0xfc] %vm860, %v1263
      %1272 = vst.msk [vmem:[#allocation4 + $0x8] sm:$0xfc] %vm862, %v1263
      %1273 = vst.msk [vmem:[#allocation4 + $0x10] sm:$0xff] %vm864, %v1265
      %1274 = vst.msk [vmem:[#allocation4 + $0x18] sm:$0xff] %vm866, %v1265
      %1275 = vst.msk [vmem:[#allocation4 + $0x20] sm:$0x3] %vm868, %v1267
      %1276 = vst.msk [vmem:[#allocation4 + $0x28] sm:$0x3] %vm870, %v1267
      %v1277 = vld [vmem:[#allocation4] sm:$0xfe]
      %v1278 = vld [vmem:[#allocation4 + $0x8] sm:$0xfe]
      %v1279 = vld [vmem:[#allocation4 + $0x10] sm:$0xff]
      %v1280 = vld [vmem:[#allocation4 + $0x18] sm:$0xff]
      %v1281 = vld [vmem:[#allocation4 + $0x20] sm:$0x1]
      %v1282 = vld [vmem:[#allocation4 + $0x28] sm:$0x1]
      %v1283 = vld [vmem:[%s5] sm:$0xff]
      %v1284 = vld [vmem:[%s5 + $0x8] sm:$0xff]
      %v1285 = vld [vmem:[%s5 + $0x10] sm:$0xff]
      %v1286 = vld [vmem:[%s5 + $0x18] sm:$0xff]
      %v1287 = vld [vmem:[%s5 + $0x20] sm:$0xff]
      %v1288 = vld [vmem:[%s5 + $0x28] sm:$0xff]
      %v1289 = vld [vmem:[%s5 + $0x30] sm:$0xff]
      %v1290 = vld [vmem:[%s5 + $0x38] sm:$0xff]
      %v1291 = vld [vmem:[%s5 + $0x40] sm:$0xff]
      %v1292 = vld [vmem:[%s5 + $0x48] sm:$0xff]
      %v1293 = vld [vmem:[%s5 + $0x50] sm:$0xff]
      %v1294 = vld [vmem:[%s5 + $0x58] sm:$0xff]
      %v1295 = vld [vmem:[%s5 + $0x60] sm:$0xff]
      %v1296 = vld [vmem:[%s5 + $0x68] sm:$0xff]
      %v1297 = vld [vmem:[%s5 + $0x70] sm:$0xff]
      %v1298 = vld [vmem:[%s5 + $0x78] sm:$0xff]
      %v1299 = vld [vmem:[%s5 + $0x80] sm:$0xff]
      %v1300 = vld [vmem:[%s5 + $0x88] sm:$0xff]
      %v1301 = vld [vmem:[%s5 + $0x90] sm:$0xff]
      %v1302 = vld [vmem:[%s5 + $0x98] sm:$0xff]
      %v1303 = vld [vmem:[#allocation4] sm:$0xfc]
      %v1304 = vld [vmem:[#allocation4 + $0x8] sm:$0xfc]
      %v1305 = vld [vmem:[#allocation4 + $0x20] sm:$0x3]
      %v1306 = vld [vmem:[#allocation4 + $0x28] sm:$0x3]
      %s1307 = scalar_lea.vmem %s5, 160
      %v1308 = vld [vmem:[%s1307] sm:$0xff]
      %v1309 = vld [vmem:[%s1307 + $0x8] sm:$0xff]
      %v1310 = vld [vmem:[%s1307 + $0x10] sm:$0xff]
      %v1311 = vld [vmem:[%s1307 + $0x18] sm:$0xff]
      %v1312 = vld [vmem:[%s1307 + $0x20] sm:$0xff]
      %v1313 = vld [vmem:[%s1307 + $0x28] sm:$0xff]
      %v1314 = vld [vmem:[%s1307 + $0x30] sm:$0xff]
      %v1315 = vld [vmem:[%s1307 + $0x38] sm:$0xff]
      %v1316 = vld [vmem:[%s1307 + $0x40] sm:$0xff]
      %v1317 = vld [vmem:[%s1307 + $0x48] sm:$0xff]
      %v1318 = vld [vmem:[%s1307 + $0x50] sm:$0xff]
      %v1319 = vld [vmem:[%s1307 + $0x58] sm:$0xff]
      %v1320 = vld [vmem:[%s1307 + $0x60] sm:$0xff]
      %v1321 = vld [vmem:[%s1307 + $0x68] sm:$0xff]
      %v1322 = vld [vmem:[%s1307 + $0x70] sm:$0xff]
      %v1323 = vld [vmem:[%s1307 + $0x78] sm:$0xff]
      %v1324 = vld [vmem:[%s1307 + $0x80] sm:$0xff]
      %v1325 = vld [vmem:[%s1307 + $0x88] sm:$0xff]
      %v1326 = vld [vmem:[%s1307 + $0x90] sm:$0xff]
      %v1327 = vld [vmem:[%s1307 + $0x98] sm:$0xff]
      %v1334 = vrot.slane %v1303, 2
      %v1335 = vrot.slane %v1279, 2
      %v1336 = vsel %vm929, %v1334, %v1335
      %v1337 = vrot.slane %v1304, 2
      %v1338 = vrot.slane %v1280, 2
      %v1339 = vsel %vm929, %v1337, %v1338
      %v1340 = vrot.slane %v1305, 2
      %v1341 = vsel %vm929, %v1335, %v1340
      %v1342 = vrot.slane %v1306, 2
      %v1343 = vsel %vm929, %v1338, %v1342
      %v1346 = vsel %vm838, %v1339, 0
      %v1348 = vsel %vm838, %v1343, 0
      %1350 = vmatprep.subr.mxu0 0.0
      %1351 = vmatpush1.msra.mxu0 %v1308
      %1352 = vmatprep.subr.mxu0 0.0
      %1353 = vmatpush1.msra.mxu0 %v1309
      %1354 = vmatprep.subr.mxu0 0.0
      %1355 = vmatpush1.msra.mxu0 %v1310
      %1356 = vmatprep.subr.mxu0 0.0
      %1357 = vmatpush1.msra.mxu0 %v1311
      %1358 = vmatprep.subr.mxu0 0.0
      %1359 = vmatpush1.msra.mxu0 %v1312
      %1360 = vmatprep.subr.mxu0 0.0
      %1361 = vmatpush1.msra.mxu0 %v1313
      %1362 = vmatprep.subr.mxu0 0.0
      %1363 = vmatpush1.msra.mxu0 %v1314
      %1364 = vmatprep.subr.mxu0 0.0
      %1365 = vmatpush1.msra.mxu0 %v1315
      %1366 = vmatprep.subr.mxu0 0.0
      %1367 = vmatpush1.msra.mxu0 %v1316
      %1368 = vmatprep.subr.mxu0 0.0
      %1369 = vmatpush1.msra.mxu0 %v1317
      %1370 = vmatprep.subr.mxu0 0.0
      %1371 = vmatpush1.msra.mxu0 %v1318
      %1372 = vmatprep.subr.mxu0 0.0
      %1373 = vmatpush1.msra.mxu0 %v1319
      %1374 = vmatprep.subr.mxu0 0.0
      %1375 = vmatpush1.msra.mxu0 %v1320
      %1376 = vmatprep.subr.mxu0 0.0
      %1377 = vmatpush1.msra.mxu0 %v1321
      %1378 = vmatprep.subr.mxu0 0.0
      %1379 = vmatpush1.msra.mxu0 %v1322
      %1380 = vmatprep.subr.mxu0 0.0
      %1381 = vmatpush1.msra.mxu0 %v1323
      %1382 = vmatprep.subr.mxu0 0.0
      %1383 = vmatpush1.msra.mxu0 %v1324
      %1384 = vmatprep.subr.mxu0 0.0
      %1385 = vmatpush1.msra.mxu0 %v1325
      %1386 = vmatprep.subr.mxu0 0.0
      %1387 = vmatpush1.msra.mxu0 %v1326
      %1388 = vmatprep.subr.mxu0 0.0
      %1389 = vmatpush1.msra.mxu0 %v1327
      %1390 = vmatprep.subr.mxu0 0.0
      %1391 = vmatpush1.msra.mxu0 0.0
      %1392 = vmatprep.subr.mxu0 0.0
      %1393 = vmatpush1.msra.mxu0 0.0
      %1394 = vmatprep.subr.mxu0 0.0
      %1395 = vmatpush1.msra.mxu0 0.0
      %1396 = vmatprep.subr.mxu0 0.0
      %1397 = vmatpush1.msra.mxu0 0.0
      %1398 = vmatprep.subr.mxu0 0.0
      %1399 = vmatpush1.msra.mxu0 0.0
      %1400 = vmatprep.subr.mxu0 0.0
      %1401 = vmatpush1.msra.mxu0 0.0
      %1402 = vmatprep.subr.mxu0 0.0
      %1403 = vmatpush1.msra.mxu0 0.0
      %1404 = vmatprep.subr.mxu0 0.0
      %1405 = vmatpush1.msra.mxu0 0.0
      %1406 = vmatprep.subr.mxu0 0.0
      %1407 = vmatpush1.msra.mxu0 0.0
      %1408 = vmatprep.subr.mxu0 0.0
      %1409 = vmatpush1.msra.mxu0 0.0
      %1410 = vmatprep.subr.mxu0 0.0
      %1411 = vmatpush1.msra.mxu0 0.0
      %1412 = vmatprep.subr.mxu0 0.0
      %1413 = vmatpush1.msra.mxu0 0.0
      %1414 = vmatprep.mubr.f32.mxu0 %v1346
      %1415 = vmatmul.mubr.f32.gmra.mrb[0].mxu0 %v1336
      %v1416 = vpop.f32.mrb[0].mxu0
      %v1417 = vadd.f32 0.0, %v1416
      %v1418 = vpop.f32.mrb[0].mxu0
      %1419 = vmatprep.mubr.f32.mxu0 %v1348
      %1420 = vmatmul.mubr.f32.gmra.mrb[0].mxu0 %v1341
      %v1421 = vpop.f32.mrb[0].mxu0
      %v1422 = vadd.f32 0.0, %v1421
      %v1423 = vpop.f32.mrb[0].mxu0
      %1424 = vdwg.mxu0
      %v1429 = vrot.slane %v1277, 1
      %v1430 = vrot.slane %v1279, 1
      %v1431 = vsel %vm1025, %v1429, %v1430
      %v1432 = vrot.slane %v1278, 1
      %v1433 = vrot.slane %v1280, 1
      %v1434 = vsel %vm1025, %v1432, %v1433
      %v1435 = vrot.slane %v1281, 1
      %v1436 = vsel %vm1025, %v1430, %v1435
      %v1437 = vrot.slane %v1282, 1
      %v1438 = vsel %vm1025, %v1433, %v1437
      %v1441 = vsel %vm838, %v1434, 0
      %v1443 = vsel %vm838, %v1438, 0
      %1445 = vmatprep.subr.mxu0 0.0
      %1446 = vmatpush1.msra.mxu0 %v1283
      %1447 = vmatprep.subr.mxu0 0.0
      %1448 = vmatpush1.msra.mxu0 %v1284
      %1449 = vmatprep.subr.mxu0 0.0
      %1450 = vmatpush1.msra.mxu0 %v1285
      %1451 = vmatprep.subr.mxu0 0.0
      %1452 = vmatpush1.msra.mxu0 %v1286
      %1453 = vmatprep.subr.mxu0 0.0
      %1454 = vmatpush1.msra.mxu0 %v1287
      %1455 = vmatprep.subr.mxu0 0.0
      %1456 = vmatpush1.msra.mxu0 %v1288
      %1457 = vmatprep.subr.mxu0 0.0
      %1458 = vmatpush1.msra.mxu0 %v1289
      %1459 = vmatprep.subr.mxu0 0.0
      %1460 = vmatpush1.msra.mxu0 %v1290
      %1461 = vmatprep.subr.mxu0 0.0
      %1462 = vmatpush1.msra.mxu0 %v1291
      %1463 = vmatprep.subr.mxu0 0.0
      %1464 = vmatpush1.msra.mxu0 %v1292
      %1465 = vmatprep.subr.mxu0 0.0
      %1466 = vmatpush1.msra.mxu0 %v1293
      %1467 = vmatprep.subr.mxu0 0.0
      %1468 = vmatpush1.msra.mxu0 %v1294
      %1469 = vmatprep.subr.mxu0 0.0
      %1470 = vmatpush1.msra.mxu0 %v1295
      %1471 = vmatprep.subr.mxu0 0.0
      %1472 = vmatpush1.msra.mxu0 %v1296
      %1473 = vmatprep.subr.mxu0 0.0
      %1474 = vmatpush1.msra.mxu0 %v1297
      %1475 = vmatprep.subr.mxu0 0.0
      %1476 = vmatpush1.msra.mxu0 %v1298
      %1477 = vmatprep.subr.mxu0 0.0
      %1478 = vmatpush1.msra.mxu0 %v1299
      %1479 = vmatprep.subr.mxu0 0.0
      %1480 = vmatpush1.msra.mxu0 %v1300
      %1481 = vmatprep.subr.mxu0 0.0
      %1482 = vmatpush1.msra.mxu0 %v1301
      %1483 = vmatprep.subr.mxu0 0.0
      %1484 = vmatpush1.msra.mxu0 %v1302
      %1485 = vmatprep.subr.mxu0 0.0
      %1486 = vmatpush1.msra.mxu0 0.0
      %1487 = vmatprep.subr.mxu0 0.0
      %1488 = vmatpush1.msra.mxu0 0.0
      %1489 = vmatprep.subr.mxu0 0.0
      %1490 = vmatpush1.msra.mxu0 0.0
      %1491 = vmatprep.subr.mxu0 0.0
      %1492 = vmatpush1.msra.mxu0 0.0
      %1493 = vmatprep.subr.mxu0 0.0
      %1494 = vmatpush1.msra.mxu0 0.0
      %1495 = vmatprep.subr.mxu0 0.0
      %1496 = vmatpush1.msra.mxu0 0.0
      %1497 = vmatprep.subr.mxu0 0.0
      %1498 = vmatpush1.msra.mxu0 0.0
      %1499 = vmatprep.subr.mxu0 0.0
      %1500 = vmatpush1.msra.mxu0 0.0
      %1501 = vmatprep.subr.mxu0 0.0
      %1502 = vmatpush1.msra.mxu0 0.0
      %1503 = vmatprep.subr.mxu0 0.0
      %1504 = vmatpush1.msra.mxu0 0.0
      %1505 = vmatprep.subr.mxu0 0.0
      %1506 = vmatpush1.msra.mxu0 0.0
      %1507 = vmatprep.subr.mxu0 0.0
      %1508 = vmatpush1.msra.mxu0 0.0
      %1509 = vmatprep.mubr.f32.mxu0 %v1441
      %1510 = vmatmul.mubr.f32.gmra.mrb[0].mxu0 %v1431
      %v1511 = vpop.f32.mrb[0].mxu0
      %v1512 = vadd.f32 %v1417, %v1511
      %v1513 = vpop.f32.mrb[0].mxu0
      %1514 = vmatprep.mubr.f32.mxu0 %v1443
      %1515 = vmatmul.mubr.f32.gmra.mrb[0].mxu0 %v1436
      %v1516 = vpop.f32.mrb[0].mxu0
      %v1517 = vadd.f32 %v1422, %v1516
      %v1518 = vpop.f32.mrb[0].mxu0
      %1519 = vdwg.mxu0
      %v1520 = vld [vmem:[#allocation4] sm:$0xf8]
      %v1521 = vld [vmem:[#allocation4 + $0x8] sm:$0xf8]
      %v1522 = vld [vmem:[#allocation4 + $0x20] sm:$0x7]
      %v1523 = vld [vmem:[#allocation4 + $0x28] sm:$0x7]
      %s1524 = scalar_lea.vmem %s5, 320
      %v1525 = vld [vmem:[%s1524] sm:$0xff]
      %v1526 = vld [vmem:[%s1524 + $0x8] sm:$0xff]
      %v1527 = vld [vmem:[%s1524 + $0x10] sm:$0xff]
      %v1528 = vld [vmem:[%s1524 + $0x18] sm:$0xff]
      %v1529 = vld [vmem:[%s1524 + $0x20] sm:$0xff]
      %v1530 = vld [vmem:[%s1524 + $0x28] sm:$0xff]
      %v1531 = vld [vmem:[%s1524 + $0x30] sm:$0xff]
      %v1532 = vld [vmem:[%s1524 + $0x38] sm:$0xff]
      %v1533 = vld [vmem:[%s1524 + $0x40] sm:$0xff]
      %v1534 = vld [vmem:[%s1524 + $0x48] sm:$0xff]
      %v1535 = vld [vmem:[%s1524 + $0x50] sm:$0xff]
      %v1536 = vld [vmem:[%s1524 + $0x58] sm:$0xff]
      %v1537 = vld [vmem:[%s1524 + $0x60] sm:$0xff]
      %v1538 = vld [vmem:[%s1524 + $0x68] sm:$0xff]
      %v1539 = vld [vmem:[%s1524 + $0x70] sm:$0xff]
      %v1540 = vld [vmem:[%s1524 + $0x78] sm:$0xff]
      %v1541 = vld [vmem:[%s1524 + $0x80] sm:$0xff]
      %v1542 = vld [vmem:[%s1524 + $0x88] sm:$0xff]
      %v1543 = vld [vmem:[%s1524 + $0x90] sm:$0xff]
      %v1544 = vld [vmem:[%s1524 + $0x98] sm:$0xff]
      %v1549 = vrot.slane %v1520, 3
      %v1550 = vrot.slane %v1279, 3
      %v1551 = vsel %vm1146, %v1549, %v1550
      %v1552 = vrot.slane %v1521, 3
      %v1553 = vrot.slane %v1280, 3
      %v1554 = vsel %vm1146, %v1552, %v1553
      %v1555 = vrot.slane %v1522, 3
      %v1556 = vsel %vm1146, %v1550, %v1555
      %v1557 = vrot.slane %v1523, 3
      %v1558 = vsel %vm1146, %v1553, %v1557
      %v1561 = vsel %vm838, %v1554, 0
      %v1563 = vsel %vm838, %v1558, 0
      %1565 = vmatprep.subr.mxu0 0.0
      %1566 = vmatpush1.msra.mxu0 %v1525
      %1567 = vmatprep.subr.mxu0 0.0
      %1568 = vmatpush1.msra.mxu0 %v1526
      %1569 = vmatprep.subr.mxu0 0.0
      %1570 = vmatpush1.msra.mxu0 %v1527
      %1571 = vmatprep.subr.mxu0 0.0
      %1572 = vmatpush1.msra.mxu0 %v1528
      %1573 = vmatprep.subr.mxu0 0.0
      %1574 = vmatpush1.msra.mxu0 %v1529
      %1575 = vmatprep.subr.mxu0 0.0
      %1576 = vmatpush1.msra.mxu0 %v1530
      %1577 = vmatprep.subr.mxu0 0.0
      %1578 = vmatpush1.msra.mxu0 %v1531
      %1579 = vmatprep.subr.mxu0 0.0
      %1580 = vmatpush1.msra.mxu0 %v1532
      %1581 = vmatprep.subr.mxu0 0.0
      %1582 = vmatpush1.msra.mxu0 %v1533
      %1583 = vmatprep.subr.mxu0 0.0
      %1584 = vmatpush1.msra.mxu0 %v1534
      %1585 = vmatprep.subr.mxu0 0.0
      %1586 = vmatpush1.msra.mxu0 %v1535
      %1587 = vmatprep.subr.mxu0 0.0
      %1588 = vmatpush1.msra.mxu0 %v1536
      %1589 = vmatprep.subr.mxu0 0.0
      %1590 = vmatpush1.msra.mxu0 %v1537
      %1591 = vmatprep.subr.mxu0 0.0
      %1592 = vmatpush1.msra.mxu0 %v1538
      %1593 = vmatprep.subr.mxu0 0.0
      %1594 = vmatpush1.msra.mxu0 %v1539
      %1595 = vmatprep.subr.mxu0 0.0
      %1596 = vmatpush1.msra.mxu0 %v1540
      %1597 = vmatprep.subr.mxu0 0.0
      %1598 = vmatpush1.msra.mxu0 %v1541
      %1599 = vmatprep.subr.mxu0 0.0
      %1600 = vmatpush1.msra.mxu0 %v1542
      %1601 = vmatprep.subr.mxu0 0.0
      %1602 = vmatpush1.msra.mxu0 %v1543
      %1603 = vmatprep.subr.mxu0 0.0
      %1604 = vmatpush1.msra.mxu0 %v1544
      %1605 = vmatprep.subr.mxu0 0.0
      %1606 = vmatpush1.msra.mxu0 0.0
      %1607 = vmatprep.subr.mxu0 0.0
      %1608 = vmatpush1.msra.mxu0 0.0
      %1609 = vmatprep.subr.mxu0 0.0
      %1610 = vmatpush1.msra.mxu0 0.0
      %1611 = vmatprep.subr.mxu0 0.0
      %1612 = vmatpush1.msra.mxu0 0.0
      %1613 = vmatprep.subr.mxu0 0.0
      %1614 = vmatpush1.msra.mxu0 0.0
      %1615 = vmatprep.subr.mxu0 0.0
      %1616 = vmatpush1.msra.mxu0 0.0
      %1617 = vmatprep.subr.mxu0 0.0
      %1618 = vmatpush1.msra.mxu0 0.0
      %1619 = vmatprep.subr.mxu0 0.0
      %1620 = vmatpush1.msra.mxu0 0.0
      %1621 = vmatprep.subr.mxu0 0.0
      %1622 = vmatpush1.msra.mxu0 0.0
      %1623 = vmatprep.subr.mxu0 0.0
      %1624 = vmatpush1.msra.mxu0 0.0
      %1625 = vmatprep.subr.mxu0 0.0
      %1626 = vmatpush1.msra.mxu0 0.0
      %1627 = vmatprep.subr.mxu0 0.0
      %1628 = vmatpush1.msra.mxu0 0.0
      %1629 = vmatprep.mubr.f32.mxu0 %v1561
      %1630 = vmatmul.mubr.f32.gmra.mrb[0].mxu0 %v1551
      %v1631 = vpop.f32.mrb[0].mxu0
      %v1632 = vadd.f32 0.0, %v1631
      %v1633 = vpop.f32.mrb[0].mxu0
      %1634 = vmatprep.mubr.f32.mxu0 %v1563
      %1635 = vmatmul.mubr.f32.gmra.mrb[0].mxu0 %v1556
      %v1636 = vpop.f32.mrb[0].mxu0
      %v1637 = vadd.f32 0.0, %v1636
      %v1638 = vpop.f32.mrb[0].mxu0
      %1639 = vdwg.mxu0
      %v1640 = vadd.f32 %v1512, %v1632
      %v1641 = vadd.f32 %v1517, %v1637
      %v1642 = vld [vmem:[%s6] sm:$0x1]
      %v1644 = vlaneseq
      %v1645 = vshrl.u32 %v1644, 7
      %v1646 = vsub.s32 0, %v1645
      %v1647 = vrot.slane %v1642, %v1646
      %v1649 = vadd.f32 %v1640, %v1647
      %v1650 = vadd.f32 %v1641, %v1647
      %v1651 = vmax.f32 %v1649, 0.0
      %v1652 = vmax.f32 %v1650, 0.0
      %1653 = vst [vmem:[#allocation3] sm:$0xff] 0.0
      %1654 = vst.msk [vmem:[#allocation3 + $0x8] sm:$0xff] %vm838, 0.0
      %1655 = vst [vmem:[#allocation3 + $0x10] sm:$0xff] 0.0
      %1656 = vst.msk [vmem:[#allocation3 + $0x18] sm:$0xff] %vm838, 0.0
      %1657 = vst [vmem:[#allocation3 + $0x20] sm:$0xf] 0.0
      %1658 = vst.msk [vmem:[#allocation3 + $0x28] sm:$0xf] %vm843, 0.0
      %v1661 = vrot.slane %v1651, 6
      %v1662 = vrot.slane %v1652, 6
      %v1663 = vsel %vm847, %v1661, %v1662
      %1664 = vrot.lane.b32.xlu0 %v1661, 16
      %v1665 = vpop.permute.xlu0 %1664
      %1666 = vrot.lane.b32.xlu0 %v1663, 16
      %v1667 = vpop.permute.xlu0 %1666
      %1668 = vrot.lane.b32.xlu0 %v1662, 16
      %v1669 = vpop.permute.xlu0 %1668
      %1673 = vst.msk [vmem:[#allocation3] sm:$0xfc] %vm860, %v1665
      %1674 = vst.msk [vmem:[#allocation3 + $0x8] sm:$0xfc] %vm862, %v1665
      %1675 = vst.msk [vmem:[#allocation3 + $0x10] sm:$0xff] %vm864, %v1667
      %1676 = vst.msk [vmem:[#allocation3 + $0x18] sm:$0xff] %vm866, %v1667
      %1677 = vst.msk [vmem:[#allocation3 + $0x20] sm:$0x3] %vm868, %v1669
      %1678 = vst.msk [vmem:[#allocation3 + $0x28] sm:$0x3] %vm870, %v1669
      %v1679 = vld [vmem:[#allocation3] sm:$0xfe]
      %v1680 = vld [vmem:[#allocation3 + $0x8] sm:$0xfe]
      %v1681 = vld [vmem:[#allocation3 + $0x10] sm:$0xff]
      %v1682 = vld [vmem:[#allocation3 + $0x18] sm:$0xff]
      %v1683 = vld [vmem:[#allocation3 + $0x20] sm:$0x1]
      %v1684 = vld [vmem:[#allocation3 + $0x28] sm:$0x1]
      %v1685 = vld [vmem:[%s7] sm:$0xff]
      %v1686 = vld [vmem:[%s7 + $0x8] sm:$0xff]
      %v1687 = vld [vmem:[%s7 + $0x10] sm:$0xff]
      %v1688 = vld [vmem:[%s7 + $0x18] sm:$0xff]
      %v1689 = vld [vmem:[%s7 + $0x20] sm:$0xff]
      %v1690 = vld [vmem:[%s7 + $0x28] sm:$0xff]
      %v1691 = vld [vmem:[%s7 + $0x30] sm:$0xff]
      %v1692 = vld [vmem:[%s7 + $0x38] sm:$0xff]
      %v1693 = vld [vmem:[%s7 + $0x40] sm:$0xff]
      %v1694 = vld [vmem:[%s7 + $0x48] sm:$0xff]
      %v1695 = vld [vmem:[%s7 + $0x50] sm:$0xff]
      %v1696 = vld [vmem:[%s7 + $0x58] sm:$0xff]
      %v1697 = vld [vmem:[%s7 + $0x60] sm:$0xff]
      %v1698 = vld [vmem:[%s7 + $0x68] sm:$0xff]
      %v1699 = vld [vmem:[%s7 + $0x70] sm:$0xff]
      %v1700 = vld [vmem:[%s7 + $0x78] sm:$0xff]
      %v1701 = vld [vmem:[%s7 + $0x80] sm:$0xff]
      %v1702 = vld [vmem:[%s7 + $0x88] sm:$0xff]
      %v1703 = vld [vmem:[%s7 + $0x90] sm:$0xff]
      %v1704 = vld [vmem:[%s7 + $0x98] sm:$0xff]
      %v1705 = vld [vmem:[#allocation3] sm:$0xfc]
      %v1706 = vld [vmem:[#allocation3 + $0x8] sm:$0xfc]
      %v1707 = vld [vmem:[#allocation3 + $0x20] sm:$0x3]
      %v1708 = vld [vmem:[#allocation3 + $0x28] sm:$0x3]
      %s1709 = scalar_lea.vmem %s7, 160
      %v1710 = vld [vmem:[%s1709] sm:$0xff]
      %v1711 = vld [vmem:[%s1709 + $0x8] sm:$0xff]
      %v1712 = vld [vmem:[%s1709 + $0x10] sm:$0xff]
      %v1713 = vld [vmem:[%s1709 + $0x18] sm:$0xff]
      %v1714 = vld [vmem:[%s1709 + $0x20] sm:$0xff]
      %v1715 = vld [vmem:[%s1709 + $0x28] sm:$0xff]
      %v1716 = vld [vmem:[%s1709 + $0x30] sm:$0xff]
      %v1717 = vld [vmem:[%s1709 + $0x38] sm:$0xff]
      %v1718 = vld [vmem:[%s1709 + $0x40] sm:$0xff]
      %v1719 = vld [vmem:[%s1709 + $0x48] sm:$0xff]
      %v1720 = vld [vmem:[%s1709 + $0x50] sm:$0xff]
      %v1721 = vld [vmem:[%s1709 + $0x58] sm:$0xff]
      %v1722 = vld [vmem:[%s1709 + $0x60] sm:$0xff]
      %v1723 = vld [vmem:[%s1709 + $0x68] sm:$0xff]
      %v1724 = vld [vmem:[%s1709 + $0x70] sm:$0xff]
      %v1725 = vld [vmem:[%s1709 + $0x78] sm:$0xff]
      %v1726 = vld [vmem:[%s1709 + $0x80] sm:$0xff]
      %v1727 = vld [vmem:[%s1709 + $0x88] sm:$0xff]
      %v1728 = vld [vmem:[%s1709 + $0x90] sm:$0xff]
      %v1729 = vld [vmem:[%s1709 + $0x98] sm:$0xff]
      %v1736 = vrot.slane %v1705, 2
      %v1737 = vrot.slane %v1681, 2
      %v1738 = vsel %vm929, %v1736, %v1737
      %v1739 = vrot.slane %v1706, 2
      %v1740 = vrot.slane %v1682, 2
      %v1741 = vsel %vm929, %v1739, %v1740
      %v1742 = vrot.slane %v1707, 2
      %v1743 = vsel %vm929, %v1737, %v1742
      %v1744 = vrot.slane %v1708, 2
      %v1745 = vsel %vm929, %v1740, %v1744
      %v1748 = vsel %vm838, %v1741, 0
      %v1750 = vsel %vm838, %v1745, 0
      %1752 = vmatprep.subr.mxu0 0.0
      %1753 = vmatpush1.msra.mxu0 %v1710
      %1754 = vmatprep.subr.mxu0 0.0
      %1755 = vmatpush1.msra.mxu0 %v1711
      %1756 = vmatprep.subr.mxu0 0.0
      %1757 = vmatpush1.msra.mxu0 %v1712
      %1758 = vmatprep.subr.mxu0 0.0
      %1759 = vmatpush1.msra.mxu0 %v1713
      %1760 = vmatprep.subr.mxu0 0.0
      %1761 = vmatpush1.msra.mxu0 %v1714
      %1762 = vmatprep.subr.mxu0 0.0
      %1763 = vmatpush1.msra.mxu0 %v1715
      %1764 = vmatprep.subr.mxu0 0.0
      %1765 = vmatpush1.msra.mxu0 %v1716
      %1766 = vmatprep.subr.mxu0 0.0
      %1767 = vmatpush1.msra.mxu0 %v1717
      %1768 = vmatprep.subr.mxu0 0.0
      %1769 = vmatpush1.msra.mxu0 %v1718
      %1770 = vmatprep.subr.mxu0 0.0
      %1771 = vmatpush1.msra.mxu0 %v1719
      %1772 = vmatprep.subr.mxu0 0.0
      %1773 = vmatpush1.msra.mxu0 %v1720
      %1774 = vmatprep.subr.mxu0 0.0
      %1775 = vmatpush1.msra.mxu0 %v1721
      %1776 = vmatprep.subr.mxu0 0.0
      %1777 = vmatpush1.msra.mxu0 %v1722
      %1778 = vmatprep.subr.mxu0 0.0
      %1779 = vmatpush1.msra.mxu0 %v1723
      %1780 = vmatprep.subr.mxu0 0.0
      %1781 = vmatpush1.msra.mxu0 %v1724
      %1782 = vmatprep.subr.mxu0 0.0
      %1783 = vmatpush1.msra.mxu0 %v1725
      %1784 = vmatprep.subr.mxu0 0.0
      %1785 = vmatpush1.msra.mxu0 %v1726
      %1786 = vmatprep.subr.mxu0 0.0
      %1787 = vmatpush1.msra.mxu0 %v1727
      %1788 = vmatprep.subr.mxu0 0.0
      %1789 = vmatpush1.msra.mxu0 %v1728
      %1790 = vmatprep.subr.mxu0 0.0
      %1791 = vmatpush1.msra.mxu0 %v1729
      %1792 = vmatprep.subr.mxu0 0.0
      %1793 = vmatpush1.msra.mxu0 0.0
      %1794 = vmatprep.subr.mxu0 0.0
      %1795 = vmatpush1.msra.mxu0 0.0
      %1796 = vmatprep.subr.mxu0 0.0
      %1797 = vmatpush1.msra.mxu0 0.0
      %1798 = vmatprep.subr.mxu0 0.0
      %1799 = vmatpush1.msra.mxu0 0.0
      %1800 = vmatprep.subr.mxu0 0.0
      %1801 = vmatpush1.msra.mxu0 0.0
      %1802 = vmatprep.subr.mxu0 0.0
      %1803 = vmatpush1.msra.mxu0 0.0
      %1804 = vmatprep.subr.mxu0 0.0
      %1805 = vmatpush1.msra.mxu0 0.0
      %1806 = vmatprep.subr.mxu0 0.0
      %1807 = vmatpush1.msra.mxu0 0.0
      %1808 = vmatprep.subr.mxu0 0.0
      %1809 = vmatpush1.msra.mxu0 0.0
      %1810 = vmatprep.subr.mxu0 0.0
      %1811 = vmatpush1.msra.mxu0 0.0
      %1812 = vmatprep.subr.mxu0 0.0
      %1813 = vmatpush1.msra.mxu0 0.0
      %1814 = vmatprep.subr.mxu0 0.0
      %1815 = vmatpush1.msra.mxu0 0.0
      %1816 = vmatprep.mubr.f32.mxu0 %v1748
      %1817 = vmatmul.mubr.f32.gmra.mrb[0].mxu0 %v1738
      %v1818 = vpop.f32.mrb[0].mxu0
      %v1819 = vadd.f32 0.0, %v1818
      %v1820 = vpop.f32.mrb[0].mxu0
      %1821 = vmatprep.mubr.f32.mxu0 %v1750
      %1822 = vmatmul.mubr.f32.gmra.mrb[0].mxu0 %v1743
      %v1823 = vpop.f32.mrb[0].mxu0
      %v1824 = vadd.f32 0.0, %v1823
      %v1825 = vpop.f32.mrb[0].mxu0
      %1826 = vdwg.mxu0
      %v1831 = vrot.slane %v1679, 1
      %v1832 = vrot.slane %v1681, 1
      %v1833 = vsel %vm1025, %v1831, %v1832
      %v1834 = vrot.slane %v1680, 1
      %v1835 = vrot.slane %v1682, 1
      %v1836 = vsel %vm1025, %v1834, %v1835
      %v1837 = vrot.slane %v1683, 1
      %v1838 = vsel %vm1025, %v1832, %v1837
      %v1839 = vrot.slane %v1684, 1
      %v1840 = vsel %vm1025, %v1835, %v1839
      %v1843 = vsel %vm838, %v1836, 0
      %v1845 = vsel %vm838, %v1840, 0
      %1847 = vmatprep.subr.mxu0 0.0
      %1848 = vmatpush1.msra.mxu0 %v1685
      %1849 = vmatprep.subr.mxu0 0.0
      %1850 = vmatpush1.msra.mxu0 %v1686
      %1851 = vmatprep.subr.mxu0 0.0
      %1852 = vmatpush1.msra.mxu0 %v1687
      %1853 = vmatprep.subr.mxu0 0.0
      %1854 = vmatpush1.msra.mxu0 %v1688
      %1855 = vmatprep.subr.mxu0 0.0
      %1856 = vmatpush1.msra.mxu0 %v1689
      %1857 = vmatprep.subr.mxu0 0.0
      %1858 = vmatpush1.msra.mxu0 %v1690
      %1859 = vmatprep.subr.mxu0 0.0
      %1860 = vmatpush1.msra.mxu0 %v1691
      %1861 = vmatprep.subr.mxu0 0.0
      %1862 = vmatpush1.msra.mxu0 %v1692
      %1863 = vmatprep.subr.mxu0 0.0
      %1864 = vmatpush1.msra.mxu0 %v1693
      %1865 = vmatprep.subr.mxu0 0.0
      %1866 = vmatpush1.msra.mxu0 %v1694
      %1867 = vmatprep.subr.mxu0 0.0
      %1868 = vmatpush1.msra.mxu0 %v1695
      %1869 = vmatprep.subr.mxu0 0.0
      %1870 = vmatpush1.msra.mxu0 %v1696
      %1871 = vmatprep.subr.mxu0 0.0
      %1872 = vmatpush1.msra.mxu0 %v1697
      %1873 = vmatprep.subr.mxu0 0.0
      %1874 = vmatpush1.msra.mxu0 %v1698
      %1875 = vmatprep.subr.mxu0 0.0
      %1876 = vmatpush1.msra.mxu0 %v1699
      %1877 = vmatprep.subr.mxu0 0.0
      %1878 = vmatpush1.msra.mxu0 %v1700
      %1879 = vmatprep.subr.mxu0 0.0
      %1880 = vmatpush1.msra.mxu0 %v1701
      %1881 = vmatprep.subr.mxu0 0.0
      %1882 = vmatpush1.msra.mxu0 %v1702
      %1883 = vmatprep.subr.mxu0 0.0
      %1884 = vmatpush1.msra.mxu0 %v1703
      %1885 = vmatprep.subr.mxu0 0.0
      %1886 = vmatpush1.msra.mxu0 %v1704
      %1887 = vmatprep.subr.mxu0 0.0
      %1888 = vmatpush1.msra.mxu0 0.0
      %1889 = vmatprep.subr.mxu0 0.0
      %1890 = vmatpush1.msra.mxu0 0.0
      %1891 = vmatprep.subr.mxu0 0.0
      %1892 = vmatpush1.msra.mxu0 0.0
      %1893 = vmatprep.subr.mxu0 0.0
      %1894 = vmatpush1.msra.mxu0 0.0
      %1895 = vmatprep.subr.mxu0 0.0
      %1896 = vmatpush1.msra.mxu0 0.0
      %1897 = vmatprep.subr.mxu0 0.0
      %1898 = vmatpush1.msra.mxu0 0.0
      %1899 = vmatprep.subr.mxu0 0.0
      %1900 = vmatpush1.msra.mxu0 0.0
      %1901 = vmatprep.subr.mxu0 0.0
      %1902 = vmatpush1.msra.mxu0 0.0
      %1903 = vmatprep.subr.mxu0 0.0
      %1904 = vmatpush1.msra.mxu0 0.0
      %1905 = vmatprep.subr.mxu0 0.0
      %1906 = vmatpush1.msra.mxu0 0.0
      %1907 = vmatprep.subr.mxu0 0.0
      %1908 = vmatpush1.msra.mxu0 0.0
      %1909 = vmatprep.subr.mxu0 0.0
      %1910 = vmatpush1.msra.mxu0 0.0
      %1911 = vmatprep.mubr.f32.mxu0 %v1843
      %1912 = vmatmul.mubr.f32.gmra.mrb[0].mxu0 %v1833
      %v1913 = vpop.f32.mrb[0].mxu0
      %v1914 = vadd.f32 %v1819, %v1913
      %v1915 = vpop.f32.mrb[0].mxu0
      %1916 = vmatprep.mubr.f32.mxu0 %v1845
      %1917 = vmatmul.mubr.f32.gmra.mrb[0].mxu0 %v1838
      %v1918 = vpop.f32.mrb[0].mxu0
      %v1919 = vadd.f32 %v1824, %v1918
      %v1920 = vpop.f32.mrb[0].mxu0
      %1921 = vdwg.mxu0
      %v1922 = vld [vmem:[#allocation3] sm:$0xf8]
      %v1923 = vld [vmem:[#allocation3 + $0x8] sm:$0xf8]
      %v1924 = vld [vmem:[#allocation3 + $0x20] sm:$0x7]
      %v1925 = vld [vmem:[#allocation3 + $0x28] sm:$0x7]
      %s1926 = scalar_lea.vmem %s7, 320
      %v1927 = vld [vmem:[%s1926] sm:$0xff]
      %v1928 = vld [vmem:[%s1926 + $0x8] sm:$0xff]
      %v1929 = vld [vmem:[%s1926 + $0x10] sm:$0xff]
      %v1930 = vld [vmem:[%s1926 + $0x18] sm:$0xff]
      %v1931 = vld [vmem:[%s1926 + $0x20] sm:$0xff]
      %v1932 = vld [vmem:[%s1926 + $0x28] sm:$0xff]
      %v1933 = vld [vmem:[%s1926 + $0x30] sm:$0xff]
      %v1934 = vld [vmem:[%s1926 + $0x38] sm:$0xff]
      %v1935 = vld [vmem:[%s1926 + $0x40] sm:$0xff]
      %v1936 = vld [vmem:[%s1926 + $0x48] sm:$0xff]
      %v1937 = vld [vmem:[%s1926 + $0x50] sm:$0xff]
      %v1938 = vld [vmem:[%s1926 + $0x58] sm:$0xff]
      %v1939 = vld [vmem:[%s1926 + $0x60] sm:$0xff]
      %v1940 = vld [vmem:[%s1926 + $0x68] sm:$0xff]
      %v1941 = vld [vmem:[%s1926 + $0x70] sm:$0xff]
      %v1942 = vld [vmem:[%s1926 + $0x78] sm:$0xff]
      %v1943 = vld [vmem:[%s1926 + $0x80] sm:$0xff]
      %v1944 = vld [vmem:[%s1926 + $0x88] sm:$0xff]
      %v1945 = vld [vmem:[%s1926 + $0x90] sm:$0xff]
      %v1946 = vld [vmem:[%s1926 + $0x98] sm:$0xff]
      %v1951 = vrot.slane %v1922, 3
      %v1952 = vrot.slane %v1681, 3
      %v1953 = vsel %vm1146, %v1951, %v1952
      %v1954 = vrot.slane %v1923, 3
      %v1955 = vrot.slane %v1682, 3
      %v1956 = vsel %vm1146, %v1954, %v1955
      %v1957 = vrot.slane %v1924, 3
      %v1958 = vsel %vm1146, %v1952, %v1957
      %v1959 = vrot.slane %v1925, 3
      %v1960 = vsel %vm1146, %v1955, %v1959
      %v1963 = vsel %vm838, %v1956, 0
      %v1965 = vsel %vm838, %v1960, 0
      %1967 = vmatprep.subr.mxu0 0.0
      %1968 = vmatpush1.msra.mxu0 %v1927
      %1969 = vmatprep.subr.mxu0 0.0
      %1970 = vmatpush1.msra.mxu0 %v1928
      %1971 = vmatprep.subr.mxu0 0.0
      %1972 = vmatpush1.msra.mxu0 %v1929
      %1973 = vmatprep.subr.mxu0 0.0
      %1974 = vmatpush1.msra.mxu0 %v1930
      %1975 = vmatprep.subr.mxu0 0.0
      %1976 = vmatpush1.msra.mxu0 %v1931
      %1977 = vmatprep.subr.mxu0 0.0
      %1978 = vmatpush1.msra.mxu0 %v1932
      %1979 = vmatprep.subr.mxu0 0.0
      %1980 = vmatpush1.msra.mxu0 %v1933
      %1981 = vmatprep.subr.mxu0 0.0
      %1982 = vmatpush1.msra.mxu0 %v1934
      %1983 = vmatprep.subr.mxu0 0.0
      %1984 = vmatpush1.msra.mxu0 %v1935
      %1985 = vmatprep.subr.mxu0 0.0
      %1986 = vmatpush1.msra.mxu0 %v1936
      %1987 = vmatprep.subr.mxu0 0.0
      %1988 = vmatpush1.msra.mxu0 %v1937
      %1989 = vmatprep.subr.mxu0 0.0
      %1990 = vmatpush1.msra.mxu0 %v1938
      %1991 = vmatprep.subr.mxu0 0.0
      %1992 = vmatpush1.msra.mxu0 %v1939
      %1993 = vmatprep.subr.mxu0 0.0
      %1994 = vmatpush1.msra.mxu0 %v1940
      %1995 = vmatprep.subr.mxu0 0.0
      %1996 = vmatpush1.msra.mxu0 %v1941
      %1997 = vmatprep.subr.mxu0 0.0
      %1998 = vmatpush1.msra.mxu0 %v1942
      %1999 = vmatprep.subr.mxu0 0.0
      %2000 = vmatpush1.msra.mxu0 %v1943
      %2001 = vmatprep.subr.mxu0 0.0
      %2002 = vmatpush1.msra.mxu0 %v1944
      %2003 = vmatprep.subr.mxu0 0.0
      %2004 = vmatpush1.msra.mxu0 %v1945
      %2005 = vmatprep.subr.mxu0 0.0
      %2006 = vmatpush1.msra.mxu0 %v1946
      %2007 = vmatprep.subr.mxu0 0.0
      %2008 = vmatpush1.msra.mxu0 0.0
      %2009 = vmatprep.subr.mxu0 0.0
      %2010 = vmatpush1.msra.mxu0 0.0
      %2011 = vmatprep.subr.mxu0 0.0
      %2012 = vmatpush1.msra.mxu0 0.0
      %2013 = vmatprep.subr.mxu0 0.0
      %2014 = vmatpush1.msra.mxu0 0.0
      %2015 = vmatprep.subr.mxu0 0.0
      %2016 = vmatpush1.msra.mxu0 0.0
      %2017 = vmatprep.subr.mxu0 0.0
      %2018 = vmatpush1.msra.mxu0 0.0
      %2019 = vmatprep.subr.mxu0 0.0
      %2020 = vmatpush1.msra.mxu0 0.0
      %2021 = vmatprep.subr.mxu0 0.0
      %2022 = vmatpush1.msra.mxu0 0.0
      %2023 = vmatprep.subr.mxu0 0.0
      %2024 = vmatpush1.msra.mxu0 0.0
      %2025 = vmatprep.subr.mxu0 0.0
      %2026 = vmatpush1.msra.mxu0 0.0
      %2027 = vmatprep.subr.mxu0 0.0
      %2028 = vmatpush1.msra.mxu0 0.0
      %2029 = vmatprep.subr.mxu0 0.0
      %2030 = vmatpush1.msra.mxu0 0.0
      %2031 = vmatprep.mubr.f32.mxu0 %v1963
      %2032 = vmatmul.mubr.f32.gmra.mrb[0].mxu0 %v1953
      %v2033 = vpop.f32.mrb[0].mxu0
      %v2034 = vadd.f32 0.0, %v2033
      %v2035 = vpop.f32.mrb[0].mxu0
      %2036 = vmatprep.mubr.f32.mxu0 %v1965
      %2037 = vmatmul.mubr.f32.gmra.mrb[0].mxu0 %v1958
      %v2038 = vpop.f32.mrb[0].mxu0
      %v2039 = vadd.f32 0.0, %v2038
      %v2040 = vpop.f32.mrb[0].mxu0
      %2041 = vdwg.mxu0
      %v2042 = vadd.f32 %v1914, %v2034
      %v2043 = vadd.f32 %v1919, %v2039
      %v2044 = vld [vmem:[%s8] sm:$0x1]
      %v2046 = vlaneseq
      %v2047 = vshrl.u32 %v2046, 7
      %v2048 = vsub.s32 0, %v2047
      %v2049 = vrot.slane %v2044, %v2048
      %v2051 = vadd.f32 %v2042, %v2049
      %v2052 = vadd.f32 %v2043, %v2049
      %vm2053 = vcmask 523264
      %2054 = vst.msk [vmem:[%s332] sm:$0xff] %vm2053, %v2051
      %2055 = vst.msk [vmem:[%s332 + $0x8] sm:$0xff] %vm2053, %v2052
      %p2056 = scmp.lt.s32.totalorder %s20, 1
      %s2057 = scalar_select %p2056, %s20, 1
      %s2058 = smul.addr %s2057, 2
      %s2059 = smul.addr %s2058, 8
      %s2060 = scalar_lea.vmem %s9, %s2059
      // Predicated region
      $region57: #{_dcn_forward_impl.1} parent=55 // pred_check
        %p2061 = pneg %p232
      $region58: #{_dcn_forward_impl.1} parent=55 // pred_check_branch
        %2063 = sbr.rel (%p2061) target = $region60
      $region59: #{_dcn_forward_impl.1} parent=55 // pred_region
        _
      $region60: #{_dcn_forward_impl.1} parent=55 // pred_fallthru
        _
    $region56: #{_dcn_forward_impl.1} parent=5 // pred_fallthru
      _
    %p2064 = scmp.le.s32.totalorder 2, %s15
    // Predicated region
    $region61: #{_dcn_forward_impl.1} parent=5 // pred_check
      %p2065 = pneg %p2064
    $region62: #{_dcn_forward_impl.1} parent=5 // pred_check_branch
      %2067 = sbr.rel (%p2065) target = $region64
    $region63: #{_dcn_forward_impl.1} parent=5 // pred_region
      %s2068 = ssub.s32 %s15, 2
      // Predicated region
      $region65: #{_dcn_forward_impl.1} parent=63 // pred_check
        %p2069 = pneg %p238
      $region66: #{_dcn_forward_impl.1} parent=63 // pred_check_branch
        %2071 = sbr.rel (%p2069) target = $region68
      $region67: #{_dcn_forward_impl.1} parent=63 // pred_region
        %p2072 = scmp.lt.s32.totalorder %s21, 1
        %s2073 = scalar_select %p2072, %s21, 1
        %s2074 = smul.addr %s2073, 2
        %s2075 = smul.addr %s2074, 8
        %s2076 = scalar_lea.vmem %s9, %s2075
      $region68: #{_dcn_forward_impl.1} parent=63 // pred_fallthru
        _
    $region64: #{_dcn_forward_impl.1} parent=5 // pred_fallthru
      _
  $region6: #{_dcn_forward_impl.1} parent=0 // loop_footer
    %s19 = sadd.s32 1, %s15
  $region7: #{_dcn_forward_impl.1} parent=0 // loop_footer_branch
    %14 = sbr.rel target = $region3
  $region8: #{_dcn_forward_impl.1} parent=0 // loop_exit
    _

</llo_original>
